<compile_context>
chip_gen: v7x
topology: tpu7x:2x2x1
jax: 0.10.0
libtpu: 0.0.40
codegen_flags: <defaults>
</compile_context>

<pallas_src>
import functools

import jax
import jax.numpy as jnp
from jax.experimental import pallas as pl
from jax.experimental.pallas import tpu as pltpu


def _round_up(n, m):
    return -(-n // m) * m


def _softplus(x):
    # Branch-free, numerically stable: one exp + one log1p per call (EUP slot).
    return jnp.maximum(x, 0.0) + jnp.log1p(jnp.exp(-jnp.abs(x)))


def _params_kernel(x_ref, w1_ref, b12_ref, w2_ref, wh_ref, bh_ref, lv_ref,
                   out_ref, *, o_dim):
    mxu_dt = w1_ref.dtype            # bf16 on the fast path, f32 otherwise

    x = x_ref[...].astype(mxu_dt)

    # hidden layer 1: concat(obs, act) already done in the wrapper -> one dot
    h1 = jnp.dot(x, w1_ref[...], preferred_element_type=jnp.float32)
    h1 = jnp.maximum(h1 + b12_ref[0:1, :], 0.0)

    # hidden layer 2
    h2 = jnp.dot(h1.astype(mxu_dt), w2_ref[...],
                 preferred_element_type=jnp.float32)
    h2 = jnp.maximum(h2 + b12_ref[1:2, :], 0.0)

    # fused, lane-padded heads: one (H, 128k) f32 matmul -> [loc | log_scale | 0]
    # (kept in f32 so bf16 error is not exponentiated into `scale`).
    heads = jnp.dot(h2, wh_ref[...],
                    preferred_element_type=jnp.float32) + bh_ref[...]

    # PETS-style soft clamp + exp on the WHOLE tile (no lane slicing / concat);
    # lv is packed so max/min logvar line up with the log_scale lanes, and the
    # clamp bounds exp() everywhere, so masked-off lanes cannot overflow.
    max_lv = lv_ref[0:1, :]
    min_lv = lv_ref[1:2, :]
    ls = max_lv - _softplus(max_lv - heads)
    ls = min_lv + _softplus(ls - min_lv)

    lane = jax.lax.broadcasted_iota(jnp.int32, heads.shape, dimension=1)
    # lanes [0, O): loc; lanes [O, ...): exp(clamped log_scale) (pad discarded).
    out_ref[...] = jnp.where(lane < o_dim, heads, jnp.exp(ls))


def pack_params(p, *, out_dim, mxu_dtype=jnp.bfloat16):
    """One-time parameter packing (hoisted off the hot forward path)."""
    H = p["w1"].shape[1]
    O = out_dim
    out_pad = max(128, _round_up(2 * O, 128))          # 128-lane-dense output

    w1 = p["w1"].astype(mxu_dtype)                                     # (IN, H)
    w2 = p["w2"].astype(mxu_dtype)                                     # (H, H)
    b12 = jnp.concatenate([p["b1"], p["b2"]], axis=0).astype(jnp.float32)  # (2, H)

    wh = jnp.zeros((H, out_pad), jnp.float32)                          # (H, 128k)
    wh = wh.at[:, :O].set(p["w_loc"]).at[:, O:2 * O].set(p["w_ls"])
    bh = jnp.zeros((1, out_pad), jnp.float32)                          # (1, 128k)
    bh = bh.at[:, :O].set(p["b_loc"]).at[:, O:2 * O].set(p["b_ls"])

    # logvar bounds aligned with the log_scale lanes; zeros elsewhere keep the
    # clamp (and hence exp) bounded on the masked / padded lanes.
    lv = jnp.zeros((2, out_pad), jnp.float32)                          # (2, 128k)
    lv = lv.at[0, O:2 * O].set(p["max_logvar"][0])
    lv = lv.at[1, O:2 * O].set(p["min_logvar"][0])

    return {"w1": w1, "b12": b12, "w2": w2, "wh": wh, "bh": bh, "lv": lv,
            "out_dim": O, "out_pad": out_pad}


def stochastic_model_forward(obs, action, packed, *, block_b=1024):
    """forward(obs, action) -> {"loc": ..., "scale": ...} via one Pallas kernel."""
    B = obs.shape[0]
    O = packed["out_dim"]
    out_pad = packed["out_pad"]
    IN = obs.shape[1] + action.shape[1]
    H = packed["w1"].shape[1]

    # ---- input prep: single concatenated activation stream ----
    x = jnp.concatenate([obs, action], axis=-1).astype(jnp.float32)    # (B, IN)

    # ---- batch tiling: multiple-of-8 tiles, >= 2 grid steps (v7x megacore) ----
    TB = min(_round_up(block_b, 8), _round_up(B, 8))
    if _round_up(B, TB) // TB == 1 and TB >= 16:
        TB = _round_up(-(-B // 2), 8)          # split so both v7x TCs get work
    B_pad = _round_up(B, TB)
    if B_pad != B:
        x = jnp.pad(x, ((0, B_pad - B), (0, 0)))
    grid = (B_pad // TB,)

    row = lambda i: (i, 0)      # batch-tiled arrays
    const = lambda i: (0, 0)    # VMEM-resident weights / biases

    # ---- VMEM budget (weights double-buffered by default) + cost hint ----
    w_itemsize = jnp.dtype(packed["w1"].dtype).itemsize
    weight_bytes = ((IN * H + H * H) * w_itemsize
                    + (2 * H + H * out_pad + out_pad + 2 * out_pad) * 4)
    io_bytes = 2 * TB * (IN + out_pad) * 4               # double-buffered x/out
    live_bytes = 3 * TB * max(H, out_pad) * 4            # h1 / h2 / heads
    vmem_limit = int(min(max(2 * weight_bytes + io_bytes + live_bytes + (8 << 20),
                             32 << 20), 64 << 20))       # <=64MiB: v7x headroom

    cost = pl.CostEstimate(
        flops=2 * B_pad * (IN * H + H * H + H * out_pad),
        transcendentals=5 * B_pad * out_pad,             # 2 softplus + final exp
        bytes_accessed=B_pad * (IN + out_pad) * 4 + weight_bytes)

    out = pl.pallas_call(
        functools.partial(_params_kernel, o_dim=O),
        out_shape=jax.ShapeDtypeStruct((B_pad, out_pad), jnp.float32),
        grid=grid,
        in_specs=[
            pl.BlockSpec((TB, IN), row),            # concat(obs, action)
            pl.BlockSpec((IN, H), const),           # W1
            pl.BlockSpec((2, H), const),            # [b1; b2]
            pl.BlockSpec((H, H), const),            # W2
            pl.BlockSpec((H, out_pad), const),      # [W_loc | W_ls | 0]  (f32)
            pl.BlockSpec((1, out_pad), const),      # [b_loc | b_ls | 0]
            pl.BlockSpec((2, out_pad), const),      # aligned [max; min] logvar
        ],
        out_specs=pl.BlockSpec((TB, out_pad), row),  # 128-lane-dense [loc|scale]
        compiler_params=pltpu.CompilerParams(
            dimension_semantics=("parallel",),       # megacore sharding on v7x
            vmem_limit_bytes=vmem_limit),
        cost_estimate=cost,
    )(x, packed["w1"], packed["b12"], packed["w2"],
      packed["wh"], packed["bh"], packed["lv"])

    return {"loc": out[:B, :O], "scale": out[:B, O:2 * O]}


def init_params(key, obs_dim, act_dim, hidden):
    """Deterministic synthetic parameter init (PyTorch Linear-like scaling)."""
    ks = jax.random.split(key, 4)

    def lin(k, fan_in, fan_out):
        bound = 1.0 / jnp.sqrt(fan_in)
        kw, kb = jax.random.split(k)
        w = jax.random.uniform(kw, (fan_in, fan_out), jnp.float32, -bound, bound)
        b = jax.random.uniform(kb, (1, fan_out), jnp.float32, -bound, bound)
        return w, b

    in_dim = obs_dim + act_dim
    w1, b1 = lin(ks[0], in_dim, hidden)
    w2, b2 = lin(ks[1], hidden, hidden)
    wloc, bloc = lin(ks[2], hidden, obs_dim)
    wls, bls = lin(ks[3], hidden, obs_dim)
    return {
        "w1": w1, "b1": b1,                  # (IN, H), (1, H)
        "w2": w2, "b2": b2,                  # (H, H), (1, H)
        "w_loc": wloc, "b_loc": bloc,        # (H, O), (1, O)
        "w_ls": wls, "b_ls": bls,            # (H, O), (1, O)
        "max_logvar": jnp.full((1, obs_dim), 2.0, jnp.float32),
        "min_logvar": jnp.full((1, obs_dim), -20.0, jnp.float32),
    }


def reference_forward(obs, action, p):
    x = jnp.concatenate([obs, action], axis=-1)
    h1 = jax.nn.relu(x @ p["w1"] + p["b1"])
    h2 = jax.nn.relu(h1 @ p["w2"] + p["b2"])
    loc = h2 @ p["w_loc"] + p["b_loc"]
    ls = h2 @ p["w_ls"] + p["b_ls"]
    ls = p["max_logvar"] - jax.nn.softplus(p["max_logvar"] - ls)
    ls = p["min_logvar"] + jax.nn.softplus(ls - p["min_logvar"])
    return {"loc": loc, "scale": jnp.exp(ls)}


if __name__ == "__main__":
    # Hidden width a multiple of 256 (fills the 2x256^2 MXU contraction on
    # v6e/v7x; also a multiple of 128 so optimal on v5e). Batch of 200 rows
    # exercises the tiled grid: 2 steps of 104 rows with zero-padded tail.
    B, OBS, ACT, HID = 200, 16, 8, 256
    key = jax.random.PRNGKey(0)
    k_obs, k_act, k_par = jax.random.split(key, 3)

    obs = jax.random.normal(k_obs, (B, OBS), jnp.float32)
    action = jax.random.normal(k_act, (B, ACT), jnp.float32)
    params = init_params(k_par, OBS, ACT, HID)

    ref = reference_forward(obs, action, params)

    # f32 MXU path: tight match to the reference formulation.
    packed32 = pack_params(params, out_dim=OBS, mxu_dtype=jnp.float32)
    out32 = stochastic_model_forward(obs, action, packed32)
    jax.block_until_ready(out32)
    assert jnp.allclose(out32["loc"], ref["loc"], atol=1e-4, rtol=1e-4)
    assert jnp.allclose(out32["scale"], ref["scale"], atol=1e-4, rtol=1e-4)

    # bf16 MXU path for W1/W2 (fast path on v6e/v7x); head matmul stays f32.
    packed16 = pack_params(params, out_dim=OBS, mxu_dtype=jnp.bfloat16)
    out16 = stochastic_model_forward(obs, action, packed16)
    jax.block_until_ready(out16)
    assert jnp.allclose(out16["loc"], ref["loc"], atol=3e-2, rtol=3e-2)
    assert jnp.allclose(out16["scale"], ref["scale"], atol=3e-2, rtol=3e-2)

    print("KERNEL_OK")
</pallas_src>

<mosaic_0001>
module attributes {stable_mosaic.version = 11 : i64} {
  func.func @_params_kernel(%arg0: i32, %arg1: memref<104x24xf32, #tpu.memory_space<vmem>>, %arg2: memref<24x256xf32, #tpu.memory_space<vmem>>, %arg3: memref<2x256xf32, #tpu.memory_space<vmem>>, %arg4: memref<256x256xf32, #tpu.memory_space<vmem>>, %arg5: memref<256x128xf32, #tpu.memory_space<vmem>>, %arg6: memref<1x128xf32, #tpu.memory_space<vmem>>, %arg7: memref<2x128xf32, #tpu.memory_space<vmem>>, %arg8: memref<104x128xf32, #tpu.memory_space<vmem>>) attributes {dimension_semantics = [#tpu.dimension_semantics<parallel>], iteration_bounds = array<i64: 2>, scalar_prefetch = 0 : i64, scratch_operands = 0 : i64, tpu.core_type = #tpu.core_type<tc>, window_params = [{transform_indices = @transform_0, window_bounds = array<i64: 104, 24>}, {pipeline_mode = #tpu.pipeline_mode<synchronous>, transform_indices = @transform_1, window_bounds = array<i64: 24, 256>}, {pipeline_mode = #tpu.pipeline_mode<synchronous>, transform_indices = @transform_2, window_bounds = array<i64: 2, 256>}, {pipeline_mode = #tpu.pipeline_mode<synchronous>, transform_indices = @transform_3, window_bounds = array<i64: 256, 256>}, {pipeline_mode = #tpu.pipeline_mode<synchronous>, transform_indices = @transform_4, window_bounds = array<i64: 256, 128>}, {pipeline_mode = #tpu.pipeline_mode<synchronous>, transform_indices = @transform_5, window_bounds = array<i64: 1, 128>}, {pipeline_mode = #tpu.pipeline_mode<synchronous>, transform_indices = @transform_6, window_bounds = array<i64: 2, 128>}, {transform_indices = @transform_7, window_bounds = array<i64: 104, 128>}]} {
    %c0 = arith.constant 0 : index
    %c0_0 = arith.constant 0 : index
    %0 = vector.load %arg1[%c0, %c0_0] : memref<104x24xf32, #tpu.memory_space<vmem>>, vector<104x24xf32>
    %c0_1 = arith.constant 0 : index
    %c0_2 = arith.constant 0 : index
    %1 = vector.load %arg2[%c0_1, %c0_2] : memref<24x256xf32, #tpu.memory_space<vmem>>, vector<24x256xf32>
    %cst = arith.constant dense<0.000000e+00> : vector<104x256xf32>
    %2 = tpu.matmul %0, %1, %cst {dimension_numbers = #tpu.dot_dimension_numbers<[1], [0], [0], [1], [0, 0, 1, 1], [], []>} : vector<104x24xf32>, vector<24x256xf32>, vector<104x256xf32> -> vector<104x256xf32>
    %c0_3 = arith.constant 0 : index
    %c0_4 = arith.constant 0 : index
    %3 = vector.load %arg3[%c0_3, %c0_4] : memref<2x256xf32, #tpu.memory_space<vmem>>, vector<1x256xf32>
    %4 = vector.broadcast %3 : vector<1x256xf32> to vector<104x256xf32>
    %5 = arith.addf %2, %4 : vector<104x256xf32>
    %cst_5 = arith.constant 0.000000e+00 : f32
    %6 = vector.broadcast %cst_5 : f32 to vector<104x256xf32>
    %7 = arith.maximumf %5, %6 : vector<104x256xf32>
    %c0_6 = arith.constant 0 : index
    %c0_7 = arith.constant 0 : index
    %8 = vector.load %arg4[%c0_6, %c0_7] : memref<256x256xf32, #tpu.memory_space<vmem>>, vector<256x256xf32>
    %cst_8 = arith.constant dense<0.000000e+00> : vector<104x256xf32>
    %9 = tpu.matmul %7, %8, %cst_8 {dimension_numbers = #tpu.dot_dimension_numbers<[1], [0], [0], [1], [0, 0, 1, 1], [], []>} : vector<104x256xf32>, vector<256x256xf32>, vector<104x256xf32> -> vector<104x256xf32>
    %c1 = arith.constant 1 : index
    %c0_9 = arith.constant 0 : index
    %10 = vector.load %arg3[%c1, %c0_9] : memref<2x256xf32, #tpu.memory_space<vmem>>, vector<1x256xf32>
    %11 = vector.broadcast %10 : vector<1x256xf32> to vector<104x256xf32>
    %12 = arith.addf %9, %11 : vector<104x256xf32>
    %cst_10 = arith.constant 0.000000e+00 : f32
    %13 = vector.broadcast %cst_10 : f32 to vector<104x256xf32>
    %14 = arith.maximumf %12, %13 : vector<104x256xf32>
    %c0_11 = arith.constant 0 : index
    %c0_12 = arith.constant 0 : index
    %15 = vector.load %arg5[%c0_11, %c0_12] : memref<256x128xf32, #tpu.memory_space<vmem>>, vector<256x128xf32>
    %cst_13 = arith.constant dense<0.000000e+00> : vector<104x128xf32>
    %16 = tpu.matmul %14, %15, %cst_13 {dimension_numbers = #tpu.dot_dimension_numbers<[1], [0], [0], [1], [0, 0, 1, 1], [], []>} : vector<104x256xf32>, vector<256x128xf32>, vector<104x128xf32> -> vector<104x128xf32>
    %c0_14 = arith.constant 0 : index
    %c0_15 = arith.constant 0 : index
    %17 = vector.load %arg6[%c0_14, %c0_15] : memref<1x128xf32, #tpu.memory_space<vmem>>, vector<1x128xf32>
    %18 = vector.broadcast %17 : vector<1x128xf32> to vector<104x128xf32>
    %19 = arith.addf %16, %18 : vector<104x128xf32>
    %c0_16 = arith.constant 0 : index
    %c0_17 = arith.constant 0 : index
    %20 = vector.load %arg7[%c0_16, %c0_17] : memref<2x128xf32, #tpu.memory_space<vmem>>, vector<1x128xf32>
    %c1_18 = arith.constant 1 : index
    %c0_19 = arith.constant 0 : index
    %21 = vector.load %arg7[%c1_18, %c0_19] : memref<2x128xf32, #tpu.memory_space<vmem>>, vector<1x128xf32>
    %22 = vector.broadcast %20 : vector<1x128xf32> to vector<104x128xf32>
    %23 = arith.subf %22, %19 : vector<104x128xf32>
    %cst_20 = arith.constant 0.000000e+00 : f32
    %24 = vector.broadcast %cst_20 : f32 to vector<104x128xf32>
    %25 = arith.maximumf %23, %24 : vector<104x128xf32>
    %26 = math.absf %23 : vector<104x128xf32>
    %cst_21 = arith.constant 0.000000e+00 : f32
    %27 = vector.broadcast %cst_21 : f32 to vector<104x128xf32>
    %28 = arith.subf %27, %26 : vector<104x128xf32>
    %29 = math.exp %28 : vector<104x128xf32>
    %30 = math.log1p %29 : vector<104x128xf32>
    %31 = arith.addf %25, %30 : vector<104x128xf32>
    %32 = vector.broadcast %20 : vector<1x128xf32> to vector<104x128xf32>
    %33 = arith.subf %32, %31 : vector<104x128xf32>
    %34 = vector.broadcast %21 : vector<1x128xf32> to vector<104x128xf32>
    %35 = arith.subf %33, %34 : vector<104x128xf32>
    %cst_22 = arith.constant 0.000000e+00 : f32
    %36 = vector.broadcast %cst_22 : f32 to vector<104x128xf32>
    %37 = arith.maximumf %35, %36 : vector<104x128xf32>
    %38 = math.absf %35 : vector<104x128xf32>
    %cst_23 = arith.constant 0.000000e+00 : f32
    %39 = vector.broadcast %cst_23 : f32 to vector<104x128xf32>
    %40 = arith.subf %39, %38 : vector<104x128xf32>
    %41 = math.exp %40 : vector<104x128xf32>
    %42 = math.log1p %41 : vector<104x128xf32>
    %43 = arith.addf %37, %42 : vector<104x128xf32>
    %44 = vector.broadcast %21 : vector<1x128xf32> to vector<104x128xf32>
    %45 = arith.addf %44, %43 : vector<104x128xf32>
    %46 = tpu.iota {dimensions = array<i32: 1>} : vector<104x128xi32>
    %c16_i32 = arith.constant 16 : i32
    %47 = vector.broadcast %c16_i32 : i32 to vector<104x128xi32>
    %48 = arith.cmpi slt, %46, %47 : vector<104x128xi32>
    %49 = math.exp %45 : vector<104x128xf32>
    %50 = arith.select %48, %19, %49 : vector<104x128xi1>, vector<104x128xf32>
    %c0_24 = arith.constant 0 : index
    %c0_25 = arith.constant 0 : index
    %51 = vector.load %arg8[%c0_24, %c0_25] : memref<104x128xf32, #tpu.memory_space<vmem>>, vector<104x128xf32>
    tpu.vector_store %arg8[%c0_24, %c0_25], %50 {strides = array<i32>} : memref<104x128xf32, #tpu.memory_space<vmem>>, vector<104x128xf32>,
    return
  }
  func.func @transform_0(%arg0: i32) -> (i32, i32) {
    %c0_i32 = arith.constant 0 : i32
    %c0_i32_0 = arith.constant 0 : i32
    return %arg0, %c0_i32 : i32, i32
  }
  func.func @transform_1(%arg0: i32) -> (i32, i32) {
    %c0_i32 = arith.constant 0 : i32
    %c0_i32_0 = arith.constant 0 : i32
    %c0_i32_1 = arith.constant 0 : i32
    return %c0_i32, %c0_i32_0 : i32, i32
  }
  func.func @transform_2(%arg0: i32) -> (i32, i32) {
    %c0_i32 = arith.constant 0 : i32
    %c0_i32_0 = arith.constant 0 : i32
    %c0_i32_1 = arith.constant 0 : i32
    return %c0_i32, %c0_i32_0 : i32, i32
  }
  func.func @transform_3(%arg0: i32) -> (i32, i32) {
    %c0_i32 = arith.constant 0 : i32
    %c0_i32_0 = arith.constant 0 : i32
    %c0_i32_1 = arith.constant 0 : i32
    return %c0_i32, %c0_i32_0 : i32, i32
  }
  func.func @transform_4(%arg0: i32) -> (i32, i32) {
    %c0_i32 = arith.constant 0 : i32
    %c0_i32_0 = arith.constant 0 : i32
    %c0_i32_1 = arith.constant 0 : i32
    return %c0_i32, %c0_i32_0 : i32, i32
  }
  func.func @transform_5(%arg0: i32) -> (i32, i32) {
    %c0_i32 = arith.constant 0 : i32
    %c0_i32_0 = arith.constant 0 : i32
    %c0_i32_1 = arith.constant 0 : i32
    return %c0_i32, %c0_i32_0 : i32, i32
  }
  func.func @transform_6(%arg0: i32) -> (i32, i32) {
    %c0_i32 = arith.constant 0 : i32
    %c0_i32_0 = arith.constant 0 : i32
    %c0_i32_1 = arith.constant 0 : i32
    return %c0_i32, %c0_i32_0 : i32, i32
  }
  func.func @transform_7(%arg0: i32) -> (i32, i32) {
    %c0_i32 = arith.constant 0 : i32
    %c0_i32_0 = arith.constant 0 : i32
    return %arg0, %c0_i32 : i32, i32
  }
}

</mosaic_0001>

<llo_original>
// kernel: tpu_custom_call.1
$region0: #{tpu_custom_call.1}
  #allocation0 [shape = 'u32[]', space=smem, size = 0x4, offset = 0x4, fixed_abs, tag = 'smem constant byte address 0x4 - core index']
  #allocation1 [shape = 'u32[144,128]{1,0:T(1,128)}', space=vmem, size = 0x12000, scoped, tag = 'internal scratch']
  %s0 = inlined_call_operand.vmem [shape: f32[208,24], index: 0, kind: input, shape index: {}]
  %s1 = inlined_call_operand.hbm [shape: f32[24,256], index: 1, kind: input, shape index: {}]
  %s2 = inlined_call_operand.vmem [shape: f32[2,256], index: 2, kind: input, shape index: {}]
  %s3 = inlined_call_operand.hbm [shape: f32[256,256], index: 3, kind: input, shape index: {}]
  %s4 = inlined_call_operand.vmem [shape: f32[256,128], index: 4, kind: input, shape index: {}]
  %s5 = inlined_call_operand.vmem [shape: f32[1,128], index: 5, kind: input, shape index: {}]
  %s6 = inlined_call_operand.vmem [shape: f32[2,128], index: 6, kind: input, shape index: {}]
  %s7 = inlined_call_operand.hbm [shape: f32[208,128], index: 7, kind: output, shape index: {}]
  %s8 = sld [smem:[#allocation0]]
  $region69: #{tpu_custom_call.1} parent=0
    _
  %s10 = ssub.s32 1, %s8
  %s11 = scalar_select 0, %s10, %s8
  $region1: #{tpu_custom_call.1} parent=0
    #allocation2 [shape = 'u8[24576]{0}', space=vmem, size = 0x6000, scoped, tag = 'input window, operand 1, single buffered']
    #allocation3 [shape = 's32[2]{0}', space=sflag, size = 0x8, scoped, tag = 'scoped memory for tpu_custom_call.1']
    #allocation4 [shape = 's32[2]{0}', space=sflag, size = 0x8, scoped, tag = 'scoped memory for tpu_custom_call.1']
    #allocation5 [shape = 'u8[262144]{0}', space=vmem, size = 0x40000, scoped, tag = 'input window, operand 3, single buffered']
    #allocation6 [shape = 's32[1]{0}', space=sflag, size = 0x4, scoped, tag = 'scoped memory for tpu_custom_call.1']
    #allocation7 [shape = 'u8[106496]{0}', space=vmem, size = 0x1a000, scoped, tag = 'output window, operand 0']
    %12 = vsyncpa [#allocation3], 0
    %13 = vsyncpa [#allocation6], 0
    %14 = vsyncpa [#allocation4], 0
    %s15 = scalar_lea.sflag [#allocation4], 1
    %16 = vsyncpa %s15, 0
    loop: start=0, step=1, limit=4
    $region2: #{tpu_custom_call.1} parent=1 // loop_pre_header
      _
    $region3: #{tpu_custom_call.1} parent=1 // loop_header
      %s18 = sphi 0, %s22
      %p19 = scmp.ge.s32.totalorder %s18, 4
      %s28 = sphi 0, %s30
      %s31 = sphi 0, %s28
      %s32 = sphi 0, %s31
      %s48 = sphi 0, %s32
      %s52 = sphi 0, %s52
      %s54 = sphi 0, %s52
      %s55 = sphi 0, %s54
      %s69 = sphi 0, %s55
      %s73 = sphi 0, %s73
      %s75 = sphi 0, %s73
      %s76 = sphi 0, %s75
      %s90 = sphi 0, %s76
      %s94 = sphi 0, %s94
      %s96 = sphi 0, %s94
      %s97 = sphi 0, %s96
      %s111 = sphi 0, %s97
      %s115 = sphi 0, %s115
      %s117 = sphi 0, %s115
      %s118 = sphi 0, %s117
      %s132 = sphi 0, %s118
      %s136 = sphi 0, %s136
      %s138 = sphi 0, %s136
      %s139 = sphi 0, %s138
      %s153 = sphi 0, %s139
      %s157 = sphi 0, %s157
      %s159 = sphi 0, %s157
      %s160 = sphi 0, %s159
      %s174 = sphi 0, %s160
      %s180 = sphi 0, %s182
      %s183 = sphi 0, %s180
      %s184 = sphi 0, %s183
      %s200 = sphi 0, %s184
    $region4: #{tpu_custom_call.1} parent=1 // loop_header_branch
      %21 = sbr.rel (%p19) target = $region8
    $region5: #{tpu_custom_call.1} parent=1 // loop_body
      %s23 = ssub.s32 %s18, 1
      %s24 = ssub.s32 %s18, 2
      %s25 = sadd.s32 %s18, 1
      %s26 = ssub.s32 %s18, %s25
      %p27 = scmp.eq.s32.totalorder %s26, 0
      %s29 = sadd.s32 %s28, 1
      %s30 = scalar_select %p27, %s28, %s29
      %p33 = pneg %p27
      %p34 = scmp.eq.s32.totalorder %s18, 1
      %p35 = por %p33, %p34
      %p36 = scmp.ne.s32.totalorder %s28, %s31
      %p37 = scmp.eq.s32.totalorder %s18, 0
      %p38 = por %p36, %p37
      %p39 = scmp.ne.s32.totalorder %s28, %s31
      %p40 = scmp.eq.s32.totalorder %s23, 1
      %p41 = por %p39, %p40
      %p42 = scmp.ne.s32.totalorder %s31, %s32
      %p43 = scmp.eq.s32.totalorder %s23, 0
      %p44 = por %p42, %p43
      %p45 = scmp.ne.s32.totalorder %s31, %s32
      %p46 = scmp.eq.s32.totalorder %s24, 1
      %p47 = por %p45, %p46
      %p49 = scmp.ne.s32.totalorder %s32, %s48
      %p50 = scmp.eq.s32.totalorder %s24, 0
      %p51 = por %p49, %p50
      %s53 = sadd.s32 %s52, 1
      %p56 = scmp.eq.s32.totalorder %s18, 1
      %p57 = scmp.ne.s32.totalorder %s52, %s54
      %p58 = scmp.eq.s32.totalorder %s18, 0
      %p59 = por %p57, %p58
      %p60 = scmp.ne.s32.totalorder %s52, %s54
      %p61 = scmp.eq.s32.totalorder %s23, 1
      %p62 = por %p60, %p61
      %p63 = scmp.ne.s32.totalorder %s54, %s55
      %p64 = scmp.eq.s32.totalorder %s23, 0
      %p65 = por %p63, %p64
      %p66 = scmp.ne.s32.totalorder %s54, %s55
      %p67 = scmp.eq.s32.totalorder %s24, 1
      %p68 = por %p66, %p67
      %p70 = scmp.ne.s32.totalorder %s55, %s69
      %p71 = scmp.eq.s32.totalorder %s24, 0
      %p72 = por %p70, %p71
      %s74 = sadd.s32 %s73, 1
      %p77 = scmp.eq.s32.totalorder %s18, 1
      %p78 = scmp.ne.s32.totalorder %s73, %s75
      %p79 = scmp.eq.s32.totalorder %s18, 0
      %p80 = por %p78, %p79
      %p81 = scmp.ne.s32.totalorder %s73, %s75
      %p82 = scmp.eq.s32.totalorder %s23, 1
      %p83 = por %p81, %p82
      %p84 = scmp.ne.s32.totalorder %s75, %s76
      %p85 = scmp.eq.s32.totalorder %s23, 0
      %p86 = por %p84, %p85
      %p87 = scmp.ne.s32.totalorder %s75, %s76
      %p88 = scmp.eq.s32.totalorder %s24, 1
      %p89 = por %p87, %p88
      %p91 = scmp.ne.s32.totalorder %s76, %s90
      %p92 = scmp.eq.s32.totalorder %s24, 0
      %p93 = por %p91, %p92
      %s95 = sadd.s32 %s94, 1
      %p98 = scmp.eq.s32.totalorder %s18, 1
      %p99 = scmp.ne.s32.totalorder %s94, %s96
      %p100 = scmp.eq.s32.totalorder %s18, 0
      %p101 = por %p99, %p100
      %p102 = scmp.ne.s32.totalorder %s94, %s96
      %p103 = scmp.eq.s32.totalorder %s23, 1
      %p104 = por %p102, %p103
      %p105 = scmp.ne.s32.totalorder %s96, %s97
      %p106 = scmp.eq.s32.totalorder %s23, 0
      %p107 = por %p105, %p106
      %p108 = scmp.ne.s32.totalorder %s96, %s97
      %p109 = scmp.eq.s32.totalorder %s24, 1
      %p110 = por %p108, %p109
      %p112 = scmp.ne.s32.totalorder %s97, %s111
      %p113 = scmp.eq.s32.totalorder %s24, 0
      %p114 = por %p112, %p113
      %s116 = sadd.s32 %s115, 1
      %p119 = scmp.eq.s32.totalorder %s18, 1
      %p120 = scmp.ne.s32.totalorder %s115, %s117
      %p121 = scmp.eq.s32.totalorder %s18, 0
      %p122 = por %p120, %p121
      %p123 = scmp.ne.s32.totalorder %s115, %s117
      %p124 = scmp.eq.s32.totalorder %s23, 1
      %p125 = por %p123, %p124
      %p126 = scmp.ne.s32.totalorder %s117, %s118
      %p127 = scmp.eq.s32.totalorder %s23, 0
      %p128 = por %p126, %p127
      %p129 = scmp.ne.s32.totalorder %s117, %s118
      %p130 = scmp.eq.s32.totalorder %s24, 1
      %p131 = por %p129, %p130
      %p133 = scmp.ne.s32.totalorder %s118, %s132
      %p134 = scmp.eq.s32.totalorder %s24, 0
      %p135 = por %p133, %p134
      %s137 = sadd.s32 %s136, 1
      %p140 = scmp.eq.s32.totalorder %s18, 1
      %p141 = scmp.ne.s32.totalorder %s136, %s138
      %p142 = scmp.eq.s32.totalorder %s18, 0
      %p143 = por %p141, %p142
      %p144 = scmp.ne.s32.totalorder %s136, %s138
      %p145 = scmp.eq.s32.totalorder %s23, 1
      %p146 = por %p144, %p145
      %p147 = scmp.ne.s32.totalorder %s138, %s139
      %p148 = scmp.eq.s32.totalorder %s23, 0
      %p149 = por %p147, %p148
      %p150 = scmp.ne.s32.totalorder %s138, %s139
      %p151 = scmp.eq.s32.totalorder %s24, 1
      %p152 = por %p150, %p151
      %p154 = scmp.ne.s32.totalorder %s139, %s153
      %p155 = scmp.eq.s32.totalorder %s24, 0
      %p156 = por %p154, %p155
      %s158 = sadd.s32 %s157, 1
      %p161 = scmp.eq.s32.totalorder %s18, 1
      %p162 = scmp.ne.s32.totalorder %s157, %s159
      %p163 = scmp.eq.s32.totalorder %s18, 0
      %p164 = por %p162, %p163
      %p165 = scmp.ne.s32.totalorder %s157, %s159
      %p166 = scmp.eq.s32.totalorder %s23, 1
      %p167 = por %p165, %p166
      %p168 = scmp.ne.s32.totalorder %s159, %s160
      %p169 = scmp.eq.s32.totalorder %s23, 0
      %p170 = por %p168, %p169
      %p171 = scmp.ne.s32.totalorder %s159, %s160
      %p172 = scmp.eq.s32.totalorder %s24, 1
      %p173 = por %p171, %p172
      %p175 = scmp.ne.s32.totalorder %s160, %s174
      %p176 = scmp.eq.s32.totalorder %s24, 0
      %p177 = por %p175, %p176
      %s178 = ssub.s32 %s18, %s25
      %p179 = scmp.eq.s32.totalorder %s178, 0
      %s181 = sadd.s32 %s180, 1
      %s182 = scalar_select %p179, %s180, %s181
      %p185 = pneg %p179
      %p186 = scmp.eq.s32.totalorder %s18, 1
      %p187 = por %p185, %p186
      %p188 = scmp.ne.s32.totalorder %s180, %s183
      %p189 = scmp.eq.s32.totalorder %s18, 0
      %p190 = por %p188, %p189
      %p191 = scmp.ne.s32.totalorder %s180, %s183
      %p192 = scmp.eq.s32.totalorder %s23, 1
      %p193 = por %p191, %p192
      %p194 = scmp.ne.s32.totalorder %s183, %s184
      %p195 = scmp.eq.s32.totalorder %s23, 0
      %p196 = por %p194, %p195
      %p197 = scmp.ne.s32.totalorder %s183, %s184
      %p198 = scmp.eq.s32.totalorder %s24, 1
      %p199 = por %p197, %p198
      %p201 = scmp.ne.s32.totalorder %s184, %s200
      %p202 = scmp.eq.s32.totalorder %s24, 0
      %p203 = por %p201, %p202
      %p204 = scmp.le.s32.totalorder 1, %s18
      %p205 = scmp.lt.s32.totalorder %s18, 3
      %p206 = pnand %p204, %p205
      %p207 = pneg %p206
      // Predicated region
      $region9: #{tpu_custom_call.1} parent=5 // pred_check
        _
      $region10: #{tpu_custom_call.1} parent=5 // pred_check_branch
        %209 = sbr.rel (%p206) target = $region12
      $region11: #{tpu_custom_call.1} parent=5 // pred_region
        %s210 = ssub.s32 %s18, 1
        // Predicated region
        $region13: #{tpu_custom_call.1} parent=11 // pred_check
          %p211 = pneg %p65
        $region14: #{tpu_custom_call.1} parent=11 // pred_check_branch
          %213 = sbr.rel (%p211) target = $region16
        $region15: #{tpu_custom_call.1} parent=11 // pred_region
          %s215 = ssub.s32 768, 768
          %216 = vsyncadd [#allocation3], %s215
          %s217 = sshll.u32 [#allocation2], 4
          %s218 = int_to_ptr.vmem [resolvable:$true] %s217
          %223 = dma.hbm_to_vmem [thread:$0]  %s1, 768, %s218, [#allocation3], 256, 256, 16
        $region16: #{tpu_custom_call.1} parent=11 // pred_fallthru
          _
        // Predicated region
        $region17: #{tpu_custom_call.1} parent=11 // pred_check
          %p224 = pneg %p86
        $region18: #{tpu_custom_call.1} parent=11 // pred_check_branch
          %226 = sbr.rel (%p224) target = $region20
        $region19: #{tpu_custom_call.1} parent=11 // pred_region
          _
        $region20: #{tpu_custom_call.1} parent=11 // pred_fallthru
          _
        // Predicated region
        $region21: #{tpu_custom_call.1} parent=11 // pred_check
          %p227 = pneg %p107
        $region22: #{tpu_custom_call.1} parent=11 // pred_check_branch
          %229 = sbr.rel (%p227) target = $region24
        $region23: #{tpu_custom_call.1} parent=11 // pred_region
          %s231 = ssub.s32 8192, 8192
          %232 = vsyncadd [#allocation6], %s231
          %s233 = sshll.u32 [#allocation5], 4
          %s234 = int_to_ptr.vmem [resolvable:$true] %s233
          %239 = dma.hbm_to_vmem [thread:$0]  %s3, 8192, %s234, [#allocation6], 256, 256, 16
        $region24: #{tpu_custom_call.1} parent=11 // pred_fallthru
          _
        // Predicated region
        $region25: #{tpu_custom_call.1} parent=11 // pred_check
          %p240 = pneg %p128
        $region26: #{tpu_custom_call.1} parent=11 // pred_check_branch
          %242 = sbr.rel (%p240) target = $region28
        $region27: #{tpu_custom_call.1} parent=11 // pred_region
          _
        $region28: #{tpu_custom_call.1} parent=11 // pred_fallthru
          _
        // Predicated region
        $region29: #{tpu_custom_call.1} parent=11 // pred_check
          %p243 = pneg %p149
        $region30: #{tpu_custom_call.1} parent=11 // pred_check_branch
          %245 = sbr.rel (%p243) target = $region32
        $region31: #{tpu_custom_call.1} parent=11 // pred_region
          _
        $region32: #{tpu_custom_call.1} parent=11 // pred_fallthru
          _
        // Predicated region
        $region33: #{tpu_custom_call.1} parent=11 // pred_check
          %p246 = pneg %p170
        $region34: #{tpu_custom_call.1} parent=11 // pred_check_branch
          %248 = sbr.rel (%p246) target = $region36
        $region35: #{tpu_custom_call.1} parent=11 // pred_region
          _
        $region36: #{tpu_custom_call.1} parent=11 // pred_fallthru
          _
      $region12: #{tpu_custom_call.1} parent=5 // pred_fallthru
        _
      %p249 = scmp.lt.s32.totalorder %s18, 2
      // Predicated region
      $region37: #{tpu_custom_call.1} parent=5 // pred_check
        %p250 = pneg %p249
      $region38: #{tpu_custom_call.1} parent=5 // pred_check_branch
        %252 = sbr.rel (%p250) target = $region40
      $region39: #{tpu_custom_call.1} parent=5 // pred_region
        // Predicated region
        $region41: #{tpu_custom_call.1} parent=39 // pred_check
          %p253 = pneg %p38
        $region42: #{tpu_custom_call.1} parent=39 // pred_check_branch
          %255 = sbr.rel (%p253) target = $region44
        $region43: #{tpu_custom_call.1} parent=39 // pred_region
          %s256 = smul.u32 13, %s18
          %p257 = scmp.lt.s32.totalorder %s256, 25
          %s258 = scalar_select %p257, %s256, 25
          %s259 = smul.addr %s258, 8
          %s260 = scalar_lea.vmem %s0, %s259
          %s261 = smul.u32 13, %s18
        $region44: #{tpu_custom_call.1} parent=39 // pred_fallthru
          _
      $region40: #{tpu_custom_call.1} parent=5 // pred_fallthru
        _
      %p262 = scmp.le.s32.totalorder 1, %s18
      %p263 = scmp.lt.s32.totalorder %s18, 3
      %p264 = pnand %p262, %p263
      %p265 = pneg %p264
      // Predicated region
      $region45: #{tpu_custom_call.1} parent=5 // pred_check
        _
      $region46: #{tpu_custom_call.1} parent=5 // pred_check_branch
        %267 = sbr.rel (%p264) target = $region48
      $region47: #{tpu_custom_call.1} parent=5 // pred_region
        %s268 = ssub.s32 %s18, 1
        // Predicated region
        $region49: #{tpu_custom_call.1} parent=47 // pred_check
          %p269 = pneg %p65
        $region50: #{tpu_custom_call.1} parent=47 // pred_check_branch
          %271 = sbr.rel (%p269) target = $region52
        $region51: #{tpu_custom_call.1} parent=47 // pred_region
          %272 = dma.done [#allocation3], 768
        $region52: #{tpu_custom_call.1} parent=47 // pred_fallthru
          _
        // Predicated region
        $region53: #{tpu_custom_call.1} parent=47 // pred_check
          %p273 = pneg %p107
        $region54: #{tpu_custom_call.1} parent=47 // pred_check_branch
          %275 = sbr.rel (%p273) target = $region56
        $region55: #{tpu_custom_call.1} parent=47 // pred_region
          %276 = dma.done [#allocation6], 8192
        $region56: #{tpu_custom_call.1} parent=47 // pred_fallthru
          _
        %s277 = smul.u32 13, %s23
        %p278 = scmp.lt.s32.totalorder %s277, 25
        %s279 = scalar_select %p278, %s277, 25
        %s280 = smul.addr %s279, 8
        %s281 = scalar_lea.vmem %s0, %s280
        %p282 = pneg %p44
        %p283 = pneg %p41
        %p284 = pneg %p65
        %p285 = pneg %p62
        %p286 = pneg %p86
        %p287 = pneg %p83
        %p288 = pneg %p107
        %p289 = pneg %p104
        %p290 = pneg %p128
        %p291 = pneg %p125
        %p292 = pneg %p149
        %p293 = pneg %p146
        %p294 = pneg %p170
        %p295 = pneg %p167
        %p296 = pneg %p196
        %p297 = pneg %p193
        %s298 = sand.u32 %s183, 1
        %s299 = scalar_lea.sflag [#allocation4], %s298
        %s300 = sand.u32 %s183, 1
        %s301 = smul.addr %s300, 104
        %s302 = scalar_lea.vmem [#allocation7], %s301
        %s303 = smul.u32 13, %s23
        %p304 = scmp.lt.s32.totalorder %s303, 25
        %s305 = scalar_select %p304, %s303, 25
        %s306 = smul.addr %s305, 8
        %s307 = scalar_lea.vmem %s0, %s306
        %s308 = smul.u32 13, %s23
        %s309 = smul.u32 13, %s23
        %v310 = vld [vmem:[%s307] sm:$0xff]
        %v311 = vld [vmem:[%s307 + $0x8] sm:$0xff]
        %v312 = vld [vmem:[%s307 + $0x10] sm:$0xff]
        %v313 = vld [vmem:[%s307 + $0x18] sm:$0xff]
        %v314 = vld [vmem:[%s307 + $0x20] sm:$0xff]
        %v315 = vld [vmem:[%s307 + $0x28] sm:$0xff]
        %v316 = vld [vmem:[%s307 + $0x30] sm:$0xff]
        %v317 = vld [vmem:[%s307 + $0x38] sm:$0xff]
        %v318 = vld [vmem:[%s307 + $0x40] sm:$0xff]
        %v319 = vld [vmem:[%s307 + $0x48] sm:$0xff]
        %v320 = vld [vmem:[%s307 + $0x50] sm:$0xff]
        %v321 = vld [vmem:[%s307 + $0x58] sm:$0xff]
        %v322 = vld [vmem:[%s307 + $0x60] sm:$0xff]
        %v323 = vld [vmem:[#allocation2] sm:$0xff]
        %v324 = vld [vmem:[#allocation2 + $0x8] sm:$0xff]
        %v325 = vld [vmem:[#allocation2 + $0x10] sm:$0xff]
        %v326 = vld [vmem:[#allocation2 + $0x18] sm:$0xff]
        %v327 = vld [vmem:[#allocation2 + $0x20] sm:$0xff]
        %v328 = vld [vmem:[#allocation2 + $0x28] sm:$0xff]
        %v329 = vld [vmem:[%s2] ss:$2 sm:$0x3]
        %v331 = vlaneseq
        %v332 = vshrl.u32 %v331, 7
        %v333 = vsub.s32 0, %v332
        %v334 = vrot.slane %v329, %v333
        %v335 = vlaneseq
        %v336 = vshrl.u32 %v335, 7
        %v337 = vsub.s32 1, %v336
        %v338 = vrot.slane %v329, %v337
        %vm341 = vcmask 195584
        %v343 = vsel %vm341, %v310, 0
        %v346 = vsel %vm341, %v311, 0
        %v349 = vsel %vm341, %v312, 0
        %v352 = vsel %vm341, %v313, 0
        %v355 = vsel %vm341, %v314, 0
        %v358 = vsel %vm341, %v315, 0
        %v361 = vsel %vm341, %v316, 0
        %v364 = vsel %vm341, %v317, 0
        %v367 = vsel %vm341, %v318, 0
        %v370 = vsel %vm341, %v319, 0
        %v373 = vsel %vm341, %v320, 0
        %v376 = vsel %vm341, %v321, 0
        %v379 = vsel %vm341, %v322, 0
        %381 = vmatprep.subr.mxu0 %v324
        %382 = vmatpush1.msra.mxu0 %v323
        %383 = vmatprep.subr.mxu0 %v326
        %384 = vmatpush1.msra.mxu0 %v325
        %385 = vmatprep.subr.mxu0 %v328
        %386 = vmatpush1.msra.mxu0 %v327
        %387 = vmatprep.subr.mxu0 0.0
        %388 = vmatpush1.msra.mxu0 0.0
        %389 = vmatprep.subr.mxu0 0.0
        %390 = vmatpush1.msra.mxu0 0.0
        %391 = vmatprep.subr.mxu0 0.0
        %392 = vmatpush1.msra.mxu0 0.0
        %393 = vmatprep.subr.mxu0 0.0
        %394 = vmatpush1.msra.mxu0 0.0
        %395 = vmatprep.subr.mxu0 0.0
        %396 = vmatpush1.msra.mxu0 0.0
        %397 = vmatprep.subr.mxu0 0.0
        %398 = vmatpush1.msra.mxu0 0.0
        %399 = vmatprep.subr.mxu0 0.0
        %400 = vmatpush1.msra.mxu0 0.0
        %401 = vmatprep.subr.mxu0 0.0
        %402 = vmatpush1.msra.mxu0 0.0
        %403 = vmatprep.subr.mxu0 0.0
        %404 = vmatpush1.msra.mxu0 0.0
        %405 = vmatprep.subr.mxu0 0.0
        %406 = vmatpush1.msra.mxu0 0.0
        %407 = vmatprep.subr.mxu0 0.0
        %408 = vmatpush1.msra.mxu0 0.0
        %409 = vmatprep.subr.mxu0 0.0
        %410 = vmatpush1.msra.mxu0 0.0
        %411 = vmatprep.subr.mxu0 0.0
        %412 = vmatpush1.msra.mxu0 0.0
        %413 = vmatprep.subr.mxu0 0.0
        %414 = vmatpush1.msra.mxu0 0.0
        %415 = vmatprep.subr.mxu0 0.0
        %416 = vmatpush1.msra.mxu0 0.0
        %417 = vmatprep.subr.mxu0 0.0
        %418 = vmatpush1.msra.mxu0 0.0
        %419 = vmatprep.subr.mxu0 0.0
        %420 = vmatpush1.msra.mxu0 0.0
        %421 = vmatprep.subr.mxu0 0.0
        %422 = vmatpush1.msra.mxu0 0.0
        %423 = vmatprep.subr.mxu0 0.0
        %424 = vmatpush1.msra.mxu0 0.0
        %425 = vmatprep.subr.mxu0 0.0
        %426 = vmatpush1.msra.mxu0 0.0
        %427 = vmatprep.subr.mxu0 0.0
        %428 = vmatpush1.msra.mxu0 0.0
        %429 = vmatprep.subr.mxu0 0.0
        %430 = vmatpush1.msra.mxu0 0.0
        %431 = vmatprep.subr.mxu0 0.0
        %432 = vmatpush1.msra.mxu0 0.0
        %433 = vmatprep.subr.mxu0 0.0
        %434 = vmatpush1.msra.mxu0 0.0
        %435 = vmatprep.subr.mxu0 0.0
        %436 = vmatpush1.msra.mxu0 0.0
        %437 = vmatprep.subr.mxu0 0.0
        %438 = vmatpush1.msra.mxu0 0.0
        %439 = vmatprep.subr.mxu0 0.0
        %440 = vmatpush1.msra.mxu0 0.0
        %441 = vmatprep.subr.mxu0 0.0
        %442 = vmatpush1.msra.mxu0 0.0
        %443 = vmatprep.subr.mxu0 0.0
        %444 = vmatpush1.msra.mxu0 0.0
        %445 = vmatprep.mubr.f32.mxu0 0.0
        %446 = vmatmul.mubr.f32.gmra.mrb[0].mxu0 %v343
        %v447 = vpop.f32.mrb[0].mxu0
        %v448 = vadd.f32 %v334, %v447
        %v449 = vpop.f32.mrb[0].mxu0
        %v450 = vadd.f32 %v338, %v449
        %451 = vmatprep.mubr.f32.mxu0 0.0
        %452 = vmatmul.mubr.f32.gmra.mrb[0].mxu0 %v346
        %v453 = vpop.f32.mrb[0].mxu0
        %v454 = vadd.f32 %v334, %v453
        %v455 = vpop.f32.mrb[0].mxu0
        %v456 = vadd.f32 %v338, %v455
        %457 = vmatprep.mubr.f32.mxu0 0.0
        %458 = vmatmul.mubr.f32.gmra.mrb[0].mxu0 %v349
        %v459 = vpop.f32.mrb[0].mxu0
        %v460 = vadd.f32 %v334, %v459
        %v461 = vpop.f32.mrb[0].mxu0
        %v462 = vadd.f32 %v338, %v461
        %463 = vmatprep.mubr.f32.mxu0 0.0
        %464 = vmatmul.mubr.f32.gmra.mrb[0].mxu0 %v352
        %v465 = vpop.f32.mrb[0].mxu0
        %v466 = vadd.f32 %v334, %v465
        %v467 = vpop.f32.mrb[0].mxu0
        %v468 = vadd.f32 %v338, %v467
        %469 = vmatprep.mubr.f32.mxu0 0.0
        %470 = vmatmul.mubr.f32.gmra.mrb[0].mxu0 %v355
        %v471 = vpop.f32.mrb[0].mxu0
        %v472 = vadd.f32 %v334, %v471
        %v473 = vpop.f32.mrb[0].mxu0
        %v474 = vadd.f32 %v338, %v473
        %475 = vmatprep.mubr.f32.mxu0 0.0
        %476 = vmatmul.mubr.f32.gmra.mrb[0].mxu0 %v358
        %v477 = vpop.f32.mrb[0].mxu0
        %v478 = vadd.f32 %v334, %v477
        %v479 = vpop.f32.mrb[0].mxu0
        %v480 = vadd.f32 %v338, %v479
        %481 = vmatprep.mubr.f32.mxu0 0.0
        %482 = vmatmul.mubr.f32.gmra.mrb[0].mxu0 %v361
        %v483 = vpop.f32.mrb[0].mxu0
        %v484 = vadd.f32 %v334, %v483
        %v485 = vpop.f32.mrb[0].mxu0
        %v486 = vadd.f32 %v338, %v485
        %487 = vmatprep.mubr.f32.mxu0 0.0
        %488 = vmatmul.mubr.f32.gmra.mrb[0].mxu0 %v364
        %v489 = vpop.f32.mrb[0].mxu0
        %v490 = vadd.f32 %v334, %v489
        %v491 = vpop.f32.mrb[0].mxu0
        %v492 = vadd.f32 %v338, %v491
        %493 = vmatprep.mubr.f32.mxu0 0.0
        %494 = vmatmul.mubr.f32.gmra.mrb[0].mxu0 %v367
        %v495 = vpop.f32.mrb[0].mxu0
        %v496 = vadd.f32 %v334, %v495
        %v497 = vpop.f32.mrb[0].mxu0
        %v498 = vadd.f32 %v338, %v497
        %499 = vmatprep.mubr.f32.mxu0 0.0
        %500 = vmatmul.mubr.f32.gmra.mrb[0].mxu0 %v370
        %v501 = vpop.f32.mrb[0].mxu0
        %v502 = vadd.f32 %v334, %v501
        %v503 = vpop.f32.mrb[0].mxu0
        %v504 = vadd.f32 %v338, %v503
        %505 = vmatprep.mubr.f32.mxu0 0.0
        %506 = vmatmul.mubr.f32.gmra.mrb[0].mxu0 %v373
        %v507 = vpop.f32.mrb[0].mxu0
        %v508 = vadd.f32 %v334, %v507
        %v509 = vpop.f32.mrb[0].mxu0
        %v510 = vadd.f32 %v338, %v509
        %511 = vmatprep.mubr.f32.mxu0 0.0
        %512 = vmatmul.mubr.f32.gmra.mrb[0].mxu0 %v376
        %v513 = vpop.f32.mrb[0].mxu0
        %v514 = vadd.f32 %v334, %v513
        %v515 = vpop.f32.mrb[0].mxu0
        %v516 = vadd.f32 %v338, %v515
        %517 = vmatprep.mubr.f32.mxu0 0.0
        %518 = vmatmul.mubr.f32.gmra.mrb[0].mxu0 %v379
        %v519 = vpop.f32.mrb[0].mxu0
        %v520 = vadd.f32 %v334, %v519
        %v521 = vpop.f32.mrb[0].mxu0
        %v522 = vadd.f32 %v338, %v521
        %523 = vdwg.mxu0
        %v524 = vmax.f32 %v448, 0.0
        %v525 = vmax.f32 %v450, 0.0
        %v526 = vmax.f32 %v454, 0.0
        %v527 = vmax.f32 %v456, 0.0
        %v528 = vmax.f32 %v460, 0.0
        %v529 = vmax.f32 %v462, 0.0
        %v530 = vmax.f32 %v466, 0.0
        %v531 = vmax.f32 %v468, 0.0
        %v532 = vmax.f32 %v472, 0.0
        %v533 = vmax.f32 %v474, 0.0
        %v534 = vmax.f32 %v478, 0.0
        %v535 = vmax.f32 %v480, 0.0
        %v536 = vmax.f32 %v484, 0.0
        %v537 = vmax.f32 %v486, 0.0
        %v538 = vmax.f32 %v490, 0.0
        %v539 = vmax.f32 %v492, 0.0
        %v540 = vmax.f32 %v496, 0.0
        %v541 = vmax.f32 %v498, 0.0
        %v542 = vmax.f32 %v502, 0.0
        %v543 = vmax.f32 %v504, 0.0
        %v544 = vmax.f32 %v508, 0.0
        %v545 = vmax.f32 %v510, 0.0
        %v546 = vmax.f32 %v514, 0.0
        %v547 = vmax.f32 %v516, 0.0
        %v548 = vmax.f32 %v520, 0.0
        %v549 = vmax.f32 %v522, 0.0
        %v550 = vld [vmem:[#allocation5] sm:$0xff]
        %v551 = vld [vmem:[#allocation5 + $0x8] sm:$0xff]
        %v552 = vld [vmem:[#allocation5 + $0x10] sm:$0xff]
        %v553 = vld [vmem:[#allocation5 + $0x18] sm:$0xff]
        %v554 = vld [vmem:[#allocation5 + $0x20] sm:$0xff]
        %v555 = vld [vmem:[#allocation5 + $0x28] sm:$0xff]
        %v556 = vld [vmem:[#allocation5 + $0x30] sm:$0xff]
        %v557 = vld [vmem:[#allocation5 + $0x38] sm:$0xff]
        %v558 = vld [vmem:[#allocation5 + $0x40] sm:$0xff]
        %v559 = vld [vmem:[#allocation5 + $0x48] sm:$0xff]
        %v560 = vld [vmem:[#allocation5 + $0x50] sm:$0xff]
        %v561 = vld [vmem:[#allocation5 + $0x58] sm:$0xff]
        %v562 = vld [vmem:[#allocation5 + $0x60] sm:$0xff]
        %v563 = vld [vmem:[#allocation5 + $0x68] sm:$0xff]
        %v564 = vld [vmem:[#allocation5 + $0x70] sm:$0xff]
        %v565 = vld [vmem:[#allocation5 + $0x78] sm:$0xff]
        %v566 = vld [vmem:[#allocation5 + $0x80] sm:$0xff]
        %v567 = vld [vmem:[#allocation5 + $0x88] sm:$0xff]
        %v568 = vld [vmem:[#allocation5 + $0x90] sm:$0xff]
        %v569 = vld [vmem:[#allocation5 + $0x98] sm:$0xff]
        %v570 = vld [vmem:[#allocation5 + $0xa0] sm:$0xff]
        %v571 = vld [vmem:[#allocation5 + $0xa8] sm:$0xff]
        %v572 = vld [vmem:[#allocation5 + $0xb0] sm:$0xff]
        %v573 = vld [vmem:[#allocation5 + $0xb8] sm:$0xff]
        %v574 = vld [vmem:[#allocation5 + $0xc0] sm:$0xff]
        %v575 = vld [vmem:[#allocation5 + $0xc8] sm:$0xff]
        %v576 = vld [vmem:[#allocation5 + $0xd0] sm:$0xff]
        %v577 = vld [vmem:[#allocation5 + $0xd8] sm:$0xff]
        %v578 = vld [vmem:[#allocation5 + $0xe0] sm:$0xff]
        %v579 = vld [vmem:[#allocation5 + $0xe8] sm:$0xff]
        %v580 = vld [vmem:[#allocation5 + $0xf0] sm:$0xff]
        %v581 = vld [vmem:[#allocation5 + $0xf8] sm:$0xff]
        %v582 = vld [vmem:[#allocation5 + $0x100] sm:$0xff]
        %v583 = vld [vmem:[#allocation5 + $0x108] sm:$0xff]
        %v584 = vld [vmem:[#allocation5 + $0x110] sm:$0xff]
        %v585 = vld [vmem:[#allocation5 + $0x118] sm:$0xff]
        %v586 = vld [vmem:[#allocation5 + $0x120] sm:$0xff]
        %v587 = vld [vmem:[#allocation5 + $0x128] sm:$0xff]
        %v588 = vld [vmem:[#allocation5 + $0x130] sm:$0xff]
        %v589 = vld [vmem:[#allocation5 + $0x138] sm:$0xff]
        %v590 = vld [vmem:[#allocation5 + $0x140] sm:$0xff]
        %v591 = vld [vmem:[#allocation5 + $0x148] sm:$0xff]
        %v592 = vld [vmem:[#allocation5 + $0x150] sm:$0xff]
        %v593 = vld [vmem:[#allocation5 + $0x158] sm:$0xff]
        %v594 = vld [vmem:[#allocation5 + $0x160] sm:$0xff]
        %v595 = vld [vmem:[#allocation5 + $0x168] sm:$0xff]
        %v596 = vld [vmem:[#allocation5 + $0x170] sm:$0xff]
        %v597 = vld [vmem:[#allocation5 + $0x178] sm:$0xff]
        %v598 = vld [vmem:[#allocation5 + $0x180] sm:$0xff]
        %v599 = vld [vmem:[#allocation5 + $0x188] sm:$0xff]
        %v600 = vld [vmem:[#allocation5 + $0x190] sm:$0xff]
        %v601 = vld [vmem:[#allocation5 + $0x198] sm:$0xff]
        %v602 = vld [vmem:[#allocation5 + $0x1a0] sm:$0xff]
        %v603 = vld [vmem:[#allocation5 + $0x1a8] sm:$0xff]
        %v604 = vld [vmem:[#allocation5 + $0x1b0] sm:$0xff]
        %v605 = vld [vmem:[#allocation5 + $0x1b8] sm:$0xff]
        %v606 = vld [vmem:[#allocation5 + $0x1c0] sm:$0xff]
        %v607 = vld [vmem:[#allocation5 + $0x1c8] sm:$0xff]
        %v608 = vld [vmem:[#allocation5 + $0x1d0] sm:$0xff]
        %v609 = vld [vmem:[#allocation5 + $0x1d8] sm:$0xff]
        %v610 = vld [vmem:[#allocation5 + $0x1e0] sm:$0xff]
        %v611 = vld [vmem:[#allocation5 + $0x1e8] sm:$0xff]
        %v612 = vld [vmem:[#allocation5 + $0x1f0] sm:$0xff]
        %v613 = vld [vmem:[#allocation5 + $0x1f8] sm:$0xff]
        %s614 = scalar_lea.vmem %s2, 1
        %v615 = vld [vmem:[%s614] ss:$2 sm:$0x3]
        %v617 = vlaneseq
        %v618 = vshrl.u32 %v617, 7
        %v619 = vsub.s32 0, %v618
        %v620 = vrot.slane %v615, %v619
        %v621 = vlaneseq
        %v622 = vshrl.u32 %v621, 7
        %v623 = vsub.s32 1, %v622
        %v624 = vrot.slane %v615, %v623
        %627 = vmatprep.subr.mxu0 %v551
        %628 = vmatpush1.msra.mxu0 %v550
        %629 = vmatprep.subr.mxu0 %v553
        %630 = vmatpush1.msra.mxu0 %v552
        %631 = vmatprep.subr.mxu0 %v555
        %632 = vmatpush1.msra.mxu0 %v554
        %633 = vmatprep.subr.mxu0 %v557
        %634 = vmatpush1.msra.mxu0 %v556
        %635 = vmatprep.subr.mxu0 %v559
        %636 = vmatpush1.msra.mxu0 %v558
        %637 = vmatprep.subr.mxu0 %v561
        %638 = vmatpush1.msra.mxu0 %v560
        %639 = vmatprep.subr.mxu0 %v563
        %640 = vmatpush1.msra.mxu0 %v562
        %641 = vmatprep.subr.mxu0 %v565
        %642 = vmatpush1.msra.mxu0 %v564
        %643 = vmatprep.subr.mxu0 %v567
        %644 = vmatpush1.msra.mxu0 %v566
        %645 = vmatprep.subr.mxu0 %v569
        %646 = vmatpush1.msra.mxu0 %v568
        %647 = vmatprep.subr.mxu0 %v571
        %648 = vmatpush1.msra.mxu0 %v570
        %649 = vmatprep.subr.mxu0 %v573
        %650 = vmatpush1.msra.mxu0 %v572
        %651 = vmatprep.subr.mxu0 %v575
        %652 = vmatpush1.msra.mxu0 %v574
        %653 = vmatprep.subr.mxu0 %v577
        %654 = vmatpush1.msra.mxu0 %v576
        %655 = vmatprep.subr.mxu0 %v579
        %656 = vmatpush1.msra.mxu0 %v578
        %657 = vmatprep.subr.mxu0 %v581
        %658 = vmatpush1.msra.mxu0 %v580
        %659 = vmatprep.subr.mxu0 %v583
        %660 = vmatpush1.msra.mxu0 %v582
        %661 = vmatprep.subr.mxu0 %v585
        %662 = vmatpush1.msra.mxu0 %v584
        %663 = vmatprep.subr.mxu0 %v587
        %664 = vmatpush1.msra.mxu0 %v586
        %665 = vmatprep.subr.mxu0 %v589
        %666 = vmatpush1.msra.mxu0 %v588
        %667 = vmatprep.subr.mxu0 %v591
        %668 = vmatpush1.msra.mxu0 %v590
        %669 = vmatprep.subr.mxu0 %v593
        %670 = vmatpush1.msra.mxu0 %v592
        %671 = vmatprep.subr.mxu0 %v595
        %672 = vmatpush1.msra.mxu0 %v594
        %673 = vmatprep.subr.mxu0 %v597
        %674 = vmatpush1.msra.mxu0 %v596
        %675 = vmatprep.subr.mxu0 %v599
        %676 = vmatpush1.msra.mxu0 %v598
        %677 = vmatprep.subr.mxu0 %v601
        %678 = vmatpush1.msra.mxu0 %v600
        %679 = vmatprep.subr.mxu0 %v603
        %680 = vmatpush1.msra.mxu0 %v602
        %681 = vmatprep.subr.mxu0 %v605
        %682 = vmatpush1.msra.mxu0 %v604
        %683 = vmatprep.subr.mxu0 %v607
        %684 = vmatpush1.msra.mxu0 %v606
        %685 = vmatprep.subr.mxu0 %v609
        %686 = vmatpush1.msra.mxu0 %v608
        %687 = vmatprep.subr.mxu0 %v611
        %688 = vmatpush1.msra.mxu0 %v610
        %689 = vmatprep.subr.mxu0 %v613
        %690 = vmatpush1.msra.mxu0 %v612
        %691 = vmatprep.mubr.f32.mxu0 %v525
        %692 = vmatmul.mubr.f32.gmra.mrb[0].mxu0 %v524
        %v693 = vpop.f32.mrb[0].mxu0
        %v694 = vadd.f32 %v620, %v693
        %v695 = vpop.f32.mrb[0].mxu0
        %v696 = vadd.f32 %v624, %v695
        %697 = vmatprep.mubr.f32.mxu0 %v527
        %698 = vmatmul.mubr.f32.gmra.mrb[0].mxu0 %v526
        %v699 = vpop.f32.mrb[0].mxu0
        %v700 = vadd.f32 %v620, %v699
        %v701 = vpop.f32.mrb[0].mxu0
        %v702 = vadd.f32 %v624, %v701
        %703 = vmatprep.mubr.f32.mxu0 %v529
        %704 = vmatmul.mubr.f32.gmra.mrb[0].mxu0 %v528
        %v705 = vpop.f32.mrb[0].mxu0
        %v706 = vadd.f32 %v620, %v705
        %v707 = vpop.f32.mrb[0].mxu0
        %v708 = vadd.f32 %v624, %v707
        %709 = vmatprep.mubr.f32.mxu0 %v531
        %710 = vmatmul.mubr.f32.gmra.mrb[0].mxu0 %v530
        %v711 = vpop.f32.mrb[0].mxu0
        %v712 = vadd.f32 %v620, %v711
        %v713 = vpop.f32.mrb[0].mxu0
        %v714 = vadd.f32 %v624, %v713
        %715 = vmatprep.mubr.f32.mxu0 %v533
        %716 = vmatmul.mubr.f32.gmra.mrb[0].mxu0 %v532
        %v717 = vpop.f32.mrb[0].mxu0
        %v718 = vadd.f32 %v620, %v717
        %v719 = vpop.f32.mrb[0].mxu0
        %v720 = vadd.f32 %v624, %v719
        %721 = vmatprep.mubr.f32.mxu0 %v535
        %722 = vmatmul.mubr.f32.gmra.mrb[0].mxu0 %v534
        %v723 = vpop.f32.mrb[0].mxu0
        %v724 = vadd.f32 %v620, %v723
        %v725 = vpop.f32.mrb[0].mxu0
        %v726 = vadd.f32 %v624, %v725
        %727 = vmatprep.mubr.f32.mxu0 %v537
        %728 = vmatmul.mubr.f32.gmra.mrb[0].mxu0 %v536
        %v729 = vpop.f32.mrb[0].mxu0
        %v730 = vadd.f32 %v620, %v729
        %v731 = vpop.f32.mrb[0].mxu0
        %v732 = vadd.f32 %v624, %v731
        %733 = vmatprep.mubr.f32.mxu0 %v539
        %734 = vmatmul.mubr.f32.gmra.mrb[0].mxu0 %v538
        %v735 = vpop.f32.mrb[0].mxu0
        %v736 = vadd.f32 %v620, %v735
        %v737 = vpop.f32.mrb[0].mxu0
        %v738 = vadd.f32 %v624, %v737
        %739 = vmatprep.mubr.f32.mxu0 %v541
        %740 = vmatmul.mubr.f32.gmra.mrb[0].mxu0 %v540
        %v741 = vpop.f32.mrb[0].mxu0
        %v742 = vadd.f32 %v620, %v741
        %v743 = vpop.f32.mrb[0].mxu0
        %v744 = vadd.f32 %v624, %v743
        %745 = vmatprep.mubr.f32.mxu0 %v543
        %746 = vmatmul.mubr.f32.gmra.mrb[0].mxu0 %v542
        %v747 = vpop.f32.mrb[0].mxu0
        %v748 = vadd.f32 %v620, %v747
        %v749 = vpop.f32.mrb[0].mxu0
        %v750 = vadd.f32 %v624, %v749
        %751 = vmatprep.mubr.f32.mxu0 %v545
        %752 = vmatmul.mubr.f32.gmra.mrb[0].mxu0 %v544
        %v753 = vpop.f32.mrb[0].mxu0
        %v754 = vadd.f32 %v620, %v753
        %v755 = vpop.f32.mrb[0].mxu0
        %v756 = vadd.f32 %v624, %v755
        %757 = vmatprep.mubr.f32.mxu0 %v547
        %758 = vmatmul.mubr.f32.gmra.mrb[0].mxu0 %v546
        %v759 = vpop.f32.mrb[0].mxu0
        %v760 = vadd.f32 %v620, %v759
        %v761 = vpop.f32.mrb[0].mxu0
        %v762 = vadd.f32 %v624, %v761
        %763 = vmatprep.mubr.f32.mxu0 %v549
        %764 = vmatmul.mubr.f32.gmra.mrb[0].mxu0 %v548
        %v765 = vpop.f32.mrb[0].mxu0
        %v766 = vadd.f32 %v620, %v765
        %v767 = vpop.f32.mrb[0].mxu0
        %v768 = vadd.f32 %v624, %v767
        %769 = vdwg.mxu0
        %v770 = vmax.f32 %v694, 0.0
        %v771 = vmax.f32 %v696, 0.0
        %v772 = vmax.f32 %v700, 0.0
        %v773 = vmax.f32 %v702, 0.0
        %v774 = vmax.f32 %v706, 0.0
        %v775 = vmax.f32 %v708, 0.0
        %v776 = vmax.f32 %v712, 0.0
        %v777 = vmax.f32 %v714, 0.0
        %v778 = vmax.f32 %v718, 0.0
        %v779 = vmax.f32 %v720, 0.0
        %v780 = vmax.f32 %v724, 0.0
        %v781 = vmax.f32 %v726, 0.0
        %v782 = vmax.f32 %v730, 0.0
        %v783 = vmax.f32 %v732, 0.0
        %v784 = vmax.f32 %v736, 0.0
        %v785 = vmax.f32 %v738, 0.0
        %v786 = vmax.f32 %v742, 0.0
        %v787 = vmax.f32 %v744, 0.0
        %v788 = vmax.f32 %v748, 0.0
        %v789 = vmax.f32 %v750, 0.0
        %v790 = vmax.f32 %v754, 0.0
        %v791 = vmax.f32 %v756, 0.0
        %v792 = vmax.f32 %v760, 0.0
        %v793 = vmax.f32 %v762, 0.0
        %v794 = vmax.f32 %v766, 0.0
        %v795 = vmax.f32 %v768, 0.0
        %v796 = vld [vmem:[%s4] sm:$0xff]
        %v797 = vld [vmem:[%s4 + $0x8] sm:$0xff]
        %v798 = vld [vmem:[%s4 + $0x10] sm:$0xff]
        %v799 = vld [vmem:[%s4 + $0x18] sm:$0xff]
        %v800 = vld [vmem:[%s4 + $0x20] sm:$0xff]
        %v801 = vld [vmem:[%s4 + $0x28] sm:$0xff]
        %v802 = vld [vmem:[%s4 + $0x30] sm:$0xff]
        %v803 = vld [vmem:[%s4 + $0x38] sm:$0xff]
        %v804 = vld [vmem:[%s4 + $0x40] sm:$0xff]
        %v805 = vld [vmem:[%s4 + $0x48] sm:$0xff]
        %v806 = vld [vmem:[%s4 + $0x50] sm:$0xff]
        %v807 = vld [vmem:[%s4 + $0x58] sm:$0xff]
        %v808 = vld [vmem:[%s4 + $0x60] sm:$0xff]
        %v809 = vld [vmem:[%s4 + $0x68] sm:$0xff]
        %v810 = vld [vmem:[%s4 + $0x70] sm:$0xff]
        %v811 = vld [vmem:[%s4 + $0x78] sm:$0xff]
        %v812 = vld [vmem:[%s4 + $0x80] sm:$0xff]
        %v813 = vld [vmem:[%s4 + $0x88] sm:$0xff]
        %v814 = vld [vmem:[%s4 + $0x90] sm:$0xff]
        %v815 = vld [vmem:[%s4 + $0x98] sm:$0xff]
        %v816 = vld [vmem:[%s4 + $0xa0] sm:$0xff]
        %v817 = vld [vmem:[%s4 + $0xa8] sm:$0xff]
        %v818 = vld [vmem:[%s4 + $0xb0] sm:$0xff]
        %v819 = vld [vmem:[%s4 + $0xb8] sm:$0xff]
        %v820 = vld [vmem:[%s4 + $0xc0] sm:$0xff]
        %v821 = vld [vmem:[%s4 + $0xc8] sm:$0xff]
        %v822 = vld [vmem:[%s4 + $0xd0] sm:$0xff]
        %v823 = vld [vmem:[%s4 + $0xd8] sm:$0xff]
        %v824 = vld [vmem:[%s4 + $0xe0] sm:$0xff]
        %v825 = vld [vmem:[%s4 + $0xe8] sm:$0xff]
        %v826 = vld [vmem:[%s4 + $0xf0] sm:$0xff]
        %v827 = vld [vmem:[%s4 + $0xf8] sm:$0xff]
        %v828 = vld [vmem:[%s5] sm:$0x1]
        %v830 = vlaneseq
        %v831 = vshrl.u32 %v830, 7
        %v832 = vsub.s32 0, %v831
        %v833 = vrot.slane %v828, %v832
        %835 = vmatprep.subr.mxu0 0.0
        %836 = vmatpush1.msra.mxu0 %v796
        %837 = vmatprep.subr.mxu0 0.0
        %838 = vmatpush1.msra.mxu0 %v797
        %839 = vmatprep.subr.mxu0 0.0
        %840 = vmatpush1.msra.mxu0 %v798
        %841 = vmatprep.subr.mxu0 0.0
        %842 = vmatpush1.msra.mxu0 %v799
        %843 = vmatprep.subr.mxu0 0.0
        %844 = vmatpush1.msra.mxu0 %v800
        %845 = vmatprep.subr.mxu0 0.0
        %846 = vmatpush1.msra.mxu0 %v801
        %847 = vmatprep.subr.mxu0 0.0
        %848 = vmatpush1.msra.mxu0 %v802
        %849 = vmatprep.subr.mxu0 0.0
        %850 = vmatpush1.msra.mxu0 %v803
        %851 = vmatprep.subr.mxu0 0.0
        %852 = vmatpush1.msra.mxu0 %v804
        %853 = vmatprep.subr.mxu0 0.0
        %854 = vmatpush1.msra.mxu0 %v805
        %855 = vmatprep.subr.mxu0 0.0
        %856 = vmatpush1.msra.mxu0 %v806
        %857 = vmatprep.subr.mxu0 0.0
        %858 = vmatpush1.msra.mxu0 %v807
        %859 = vmatprep.subr.mxu0 0.0
        %860 = vmatpush1.msra.mxu0 %v808
        %861 = vmatprep.subr.mxu0 0.0
        %862 = vmatpush1.msra.mxu0 %v809
        %863 = vmatprep.subr.mxu0 0.0
        %864 = vmatpush1.msra.mxu0 %v810
        %865 = vmatprep.subr.mxu0 0.0
        %866 = vmatpush1.msra.mxu0 %v811
        %867 = vmatprep.subr.mxu0 0.0
        %868 = vmatpush1.msra.mxu0 %v812
        %869 = vmatprep.subr.mxu0 0.0
        %870 = vmatpush1.msra.mxu0 %v813
        %871 = vmatprep.subr.mxu0 0.0
        %872 = vmatpush1.msra.mxu0 %v814
        %873 = vmatprep.subr.mxu0 0.0
        %874 = vmatpush1.msra.mxu0 %v815
        %875 = vmatprep.subr.mxu0 0.0
        %876 = vmatpush1.msra.mxu0 %v816
        %877 = vmatprep.subr.mxu0 0.0
        %878 = vmatpush1.msra.mxu0 %v817
        %879 = vmatprep.subr.mxu0 0.0
        %880 = vmatpush1.msra.mxu0 %v818
        %881 = vmatprep.subr.mxu0 0.0
        %882 = vmatpush1.msra.mxu0 %v819
        %883 = vmatprep.subr.mxu0 0.0
        %884 = vmatpush1.msra.mxu0 %v820
        %885 = vmatprep.subr.mxu0 0.0
        %886 = vmatpush1.msra.mxu0 %v821
        %887 = vmatprep.subr.mxu0 0.0
        %888 = vmatpush1.msra.mxu0 %v822
        %889 = vmatprep.subr.mxu0 0.0
        %890 = vmatpush1.msra.mxu0 %v823
        %891 = vmatprep.subr.mxu0 0.0
        %892 = vmatpush1.msra.mxu0 %v824
        %893 = vmatprep.subr.mxu0 0.0
        %894 = vmatpush1.msra.mxu0 %v825
        %895 = vmatprep.subr.mxu0 0.0
        %896 = vmatpush1.msra.mxu0 %v826
        %897 = vmatprep.subr.mxu0 0.0
        %898 = vmatpush1.msra.mxu0 %v827
        %899 = vmatprep.mubr.f32.mxu0 %v771
        %900 = vmatmul.mubr.f32.gmra.mrb[0].mxu0 %v770
        %v901 = vpop.f32.mrb[0].mxu0
        %v902 = vadd.f32 %v833, %v901
        %v903 = vpop.f32.mrb[0].mxu0
        %904 = vmatprep.mubr.f32.mxu0 %v773
        %905 = vmatmul.mubr.f32.gmra.mrb[0].mxu0 %v772
        %v906 = vpop.f32.mrb[0].mxu0
        %v907 = vadd.f32 %v833, %v906
        %v908 = vpop.f32.mrb[0].mxu0
        %909 = vmatprep.mubr.f32.mxu0 %v775
        %910 = vmatmul.mubr.f32.gmra.mrb[0].mxu0 %v774
        %v911 = vpop.f32.mrb[0].mxu0
        %v912 = vadd.f32 %v833, %v911
        %v913 = vpop.f32.mrb[0].mxu0
        %914 = vmatprep.mubr.f32.mxu0 %v777
        %915 = vmatmul.mubr.f32.gmra.mrb[0].mxu0 %v776
        %v916 = vpop.f32.mrb[0].mxu0
        %v917 = vadd.f32 %v833, %v916
        %v918 = vpop.f32.mrb[0].mxu0
        %919 = vmatprep.mubr.f32.mxu0 %v779
        %920 = vmatmul.mubr.f32.gmra.mrb[0].mxu0 %v778
        %v921 = vpop.f32.mrb[0].mxu0
        %v922 = vadd.f32 %v833, %v921
        %v923 = vpop.f32.mrb[0].mxu0
        %924 = vmatprep.mubr.f32.mxu0 %v781
        %925 = vmatmul.mubr.f32.gmra.mrb[0].mxu0 %v780
        %v926 = vpop.f32.mrb[0].mxu0
        %v927 = vadd.f32 %v833, %v926
        %v928 = vpop.f32.mrb[0].mxu0
        %929 = vmatprep.mubr.f32.mxu0 %v783
        %930 = vmatmul.mubr.f32.gmra.mrb[0].mxu0 %v782
        %v931 = vpop.f32.mrb[0].mxu0
        %v932 = vadd.f32 %v833, %v931
        %v933 = vpop.f32.mrb[0].mxu0
        %934 = vmatprep.mubr.f32.mxu0 %v785
        %935 = vmatmul.mubr.f32.gmra.mrb[0].mxu0 %v784
        %v936 = vpop.f32.mrb[0].mxu0
        %v937 = vadd.f32 %v833, %v936
        %v938 = vpop.f32.mrb[0].mxu0
        %939 = vmatprep.mubr.f32.mxu0 %v787
        %940 = vmatmul.mubr.f32.gmra.mrb[0].mxu0 %v786
        %v941 = vpop.f32.mrb[0].mxu0
        %v942 = vadd.f32 %v833, %v941
        %v943 = vpop.f32.mrb[0].mxu0
        %944 = vmatprep.mubr.f32.mxu0 %v789
        %945 = vmatmul.mubr.f32.gmra.mrb[0].mxu0 %v788
        %v946 = vpop.f32.mrb[0].mxu0
        %v947 = vadd.f32 %v833, %v946
        %v948 = vpop.f32.mrb[0].mxu0
        %949 = vmatprep.mubr.f32.mxu0 %v791
        %950 = vmatmul.mubr.f32.gmra.mrb[0].mxu0 %v790
        %v951 = vpop.f32.mrb[0].mxu0
        %v952 = vadd.f32 %v833, %v951
        %v953 = vpop.f32.mrb[0].mxu0
        %954 = vmatprep.mubr.f32.mxu0 %v793
        %955 = vmatmul.mubr.f32.gmra.mrb[0].mxu0 %v792
        %v956 = vpop.f32.mrb[0].mxu0
        %v957 = vadd.f32 %v833, %v956
        %v958 = vpop.f32.mrb[0].mxu0
        %959 = vmatprep.mubr.f32.mxu0 %v795
        %960 = vmatmul.mubr.f32.gmra.mrb[0].mxu0 %v794
        %v961 = vpop.f32.mrb[0].mxu0
        %v962 = vadd.f32 %v833, %v961
        %v963 = vpop.f32.mrb[0].mxu0
        %964 = vdwg.mxu0
        %v965 = vld [vmem:[%s6] sm:$0x1]
        %v966 = vld [vmem:[%s6 + $0x1] sm:$0x1]
        %v967 = vlaneseq
        %v968 = vshrl.u32 %v967, 7
        %v969 = vsub.s32 0, %v968
        %v970 = vrot.slane %v965, %v969
        %v971 = vsub.f32 %v970, %v902
        %v972 = vsub.f32 %v970, %v907
        %v973 = vsub.f32 %v970, %v912
        %v974 = vsub.f32 %v970, %v917
        %v975 = vsub.f32 %v970, %v922
        %v976 = vsub.f32 %v970, %v927
        %v977 = vsub.f32 %v970, %v932
        %v978 = vsub.f32 %v970, %v937
        %v979 = vsub.f32 %v970, %v942
        %v980 = vsub.f32 %v970, %v947
        %v981 = vsub.f32 %v970, %v952
        %v982 = vsub.f32 %v970, %v957
        %v983 = vsub.f32 %v970, %v962
        %v984 = vmax.f32 %v971, 0.0
        %v985 = vmax.f32 %v972, 0.0
        %v986 = vmax.f32 %v973, 0.0
        %v987 = vmax.f32 %v974, 0.0
        %v988 = vmax.f32 %v975, 0.0
        %v989 = vmax.f32 %v976, 0.0
        %v990 = vmax.f32 %v977, 0.0
        %v991 = vmax.f32 %v978, 0.0
        %v992 = vmax.f32 %v979, 0.0
        %v993 = vmax.f32 %v980, 0.0
        %v994 = vmax.f32 %v981, 0.0
        %v995 = vmax.f32 %v982, 0.0
        %v996 = vmax.f32 %v983, 0.0
        %v997 = vand.u32 2147483647, %v971
        %v998 = vand.u32 2147483647, %v972
        %v999 = vand.u32 2147483647, %v973
        %v1000 = vand.u32 2147483647, %v974
        %v1001 = vand.u32 2147483647, %v975
        %v1002 = vand.u32 2147483647, %v976
        %v1003 = vand.u32 2147483647, %v977
        %v1004 = vand.u32 2147483647, %v978
        %v1005 = vand.u32 2147483647, %v979
        %v1006 = vand.u32 2147483647, %v980
        %v1007 = vand.u32 2147483647, %v981
        %v1008 = vand.u32 2147483647, %v982
        %v1009 = vand.u32 2147483647, %v983
        %v1010 = vsub.f32 0.0, %v997
        %v1011 = vsub.f32 0.0, %v998
        %v1012 = vsub.f32 0.0, %v999
        %v1013 = vsub.f32 0.0, %v1000
        %v1014 = vsub.f32 0.0, %v1001
        %v1015 = vsub.f32 0.0, %v1002
        %v1016 = vsub.f32 0.0, %v1003
        %v1017 = vsub.f32 0.0, %v1004
        %v1018 = vsub.f32 0.0, %v1005
        %v1019 = vsub.f32 0.0, %v1006
        %v1020 = vsub.f32 0.0, %v1007
        %v1021 = vsub.f32 0.0, %v1008
        %v1022 = vsub.f32 0.0, %v1009
        %v1023 = vmul.f32 %v1010, 1.442695
        %v1024 = vpow.pop %v1023
        %v1025 = vmul.f32 %v1011, 1.442695
        %v1026 = vpow.pop %v1025
        %v1027 = vmul.f32 %v1012, 1.442695
        %v1028 = vpow.pop %v1027
        %v1029 = vmul.f32 %v1013, 1.442695
        %v1030 = vpow.pop %v1029
        %v1031 = vmul.f32 %v1014, 1.442695
        %v1032 = vpow.pop %v1031
        %v1033 = vmul.f32 %v1015, 1.442695
        %v1034 = vpow.pop %v1033
        %v1035 = vmul.f32 %v1016, 1.442695
        %v1036 = vpow.pop %v1035
        %v1037 = vmul.f32 %v1017, 1.442695
        %v1038 = vpow.pop %v1037
        %v1039 = vmul.f32 %v1018, 1.442695
        %v1040 = vpow.pop %v1039
        %v1041 = vmul.f32 %v1019, 1.442695
        %v1042 = vpow.pop %v1041
        %v1043 = vmul.f32 %v1020, 1.442695
        %v1044 = vpow.pop %v1043
        %v1045 = vmul.f32 %v1021, 1.442695
        %v1046 = vpow.pop %v1045
        %v1047 = vmul.f32 %v1022, 1.442695
        %v1048 = vpow.pop %v1047
        %v1049 = vadd.f32 %v1024, 1.0
        %v1050 = vlog2.pop %v1049
        %v1051 = vmul.f32 %v1050, 0.6931472
        %v1052 = vmul.f32 -0.5, %v1024
        %v1053 = vadd.f32 %v1052, 1.0
        %v1054 = vmul.f32 %v1053, %v1024
        %v1055 = vand.u32 2147483647, %v1024
        %vm1056 = vcmp.lt.f32.partialorder %v1055, 0.0004427343
        %v1057 = vsel %vm1056, %v1054, %v1051
        %v1058 = vadd.f32 %v1026, 1.0
        %v1059 = vlog2.pop %v1058
        %v1060 = vmul.f32 %v1059, 0.6931472
        %v1061 = vmul.f32 -0.5, %v1026
        %v1062 = vadd.f32 %v1061, 1.0
        %v1063 = vmul.f32 %v1062, %v1026
        %v1064 = vand.u32 2147483647, %v1026
        %vm1065 = vcmp.lt.f32.partialorder %v1064, 0.0004427343
        %v1066 = vsel %vm1065, %v1063, %v1060
        %v1067 = vadd.f32 %v1028, 1.0
        %v1068 = vlog2.pop %v1067
        %v1069 = vmul.f32 %v1068, 0.6931472
        %v1070 = vmul.f32 -0.5, %v1028
        %v1071 = vadd.f32 %v1070, 1.0
        %v1072 = vmul.f32 %v1071, %v1028
        %v1073 = vand.u32 2147483647, %v1028
        %vm1074 = vcmp.lt.f32.partialorder %v1073, 0.0004427343
        %v1075 = vsel %vm1074, %v1072, %v1069
        %v1076 = vadd.f32 %v1030, 1.0
        %v1077 = vlog2.pop %v1076
        %v1078 = vmul.f32 %v1077, 0.6931472
        %v1079 = vmul.f32 -0.5, %v1030
        %v1080 = vadd.f32 %v1079, 1.0
        %v1081 = vmul.f32 %v1080, %v1030
        %v1082 = vand.u32 2147483647, %v1030
        %vm1083 = vcmp.lt.f32.partialorder %v1082, 0.0004427343
        %v1084 = vsel %vm1083, %v1081, %v1078
        %v1085 = vadd.f32 %v1032, 1.0
        %v1086 = vlog2.pop %v1085
        %v1087 = vmul.f32 %v1086, 0.6931472
        %v1088 = vmul.f32 -0.5, %v1032
        %v1089 = vadd.f32 %v1088, 1.0
        %v1090 = vmul.f32 %v1089, %v1032
        %v1091 = vand.u32 2147483647, %v1032
        %vm1092 = vcmp.lt.f32.partialorder %v1091, 0.0004427343
        %v1093 = vsel %vm1092, %v1090, %v1087
        %v1094 = vadd.f32 %v1034, 1.0
        %v1095 = vlog2.pop %v1094
        %v1096 = vmul.f32 %v1095, 0.6931472
        %v1097 = vmul.f32 -0.5, %v1034
        %v1098 = vadd.f32 %v1097, 1.0
        %v1099 = vmul.f32 %v1098, %v1034
        %v1100 = vand.u32 2147483647, %v1034
        %vm1101 = vcmp.lt.f32.partialorder %v1100, 0.0004427343
        %v1102 = vsel %vm1101, %v1099, %v1096
        %v1103 = vadd.f32 %v1036, 1.0
        %v1104 = vlog2.pop %v1103
        %v1105 = vmul.f32 %v1104, 0.6931472
        %v1106 = vmul.f32 -0.5, %v1036
        %v1107 = vadd.f32 %v1106, 1.0
        %v1108 = vmul.f32 %v1107, %v1036
        %v1109 = vand.u32 2147483647, %v1036
        %vm1110 = vcmp.lt.f32.partialorder %v1109, 0.0004427343
        %v1111 = vsel %vm1110, %v1108, %v1105
        %v1112 = vadd.f32 %v1038, 1.0
        %v1113 = vlog2.pop %v1112
        %v1114 = vmul.f32 %v1113, 0.6931472
        %v1115 = vmul.f32 -0.5, %v1038
        %v1116 = vadd.f32 %v1115, 1.0
        %v1117 = vmul.f32 %v1116, %v1038
        %v1118 = vand.u32 2147483647, %v1038
        %vm1119 = vcmp.lt.f32.partialorder %v1118, 0.0004427343
        %v1120 = vsel %vm1119, %v1117, %v1114
        %v1121 = vadd.f32 %v1040, 1.0
        %v1122 = vlog2.pop %v1121
        %v1123 = vmul.f32 %v1122, 0.6931472
        %v1124 = vmul.f32 -0.5, %v1040
        %v1125 = vadd.f32 %v1124, 1.0
        %v1126 = vmul.f32 %v1125, %v1040
        %v1127 = vand.u32 2147483647, %v1040
        %vm1128 = vcmp.lt.f32.partialorder %v1127, 0.0004427343
        %v1129 = vsel %vm1128, %v1126, %v1123
        %v1130 = vadd.f32 %v1042, 1.0
        %v1131 = vlog2.pop %v1130
        %v1132 = vmul.f32 %v1131, 0.6931472
        %v1133 = vmul.f32 -0.5, %v1042
        %v1134 = vadd.f32 %v1133, 1.0
        %v1135 = vmul.f32 %v1134, %v1042
        %v1136 = vand.u32 2147483647, %v1042
        %vm1137 = vcmp.lt.f32.partialorder %v1136, 0.0004427343
        %v1138 = vsel %vm1137, %v1135, %v1132
        %v1139 = vadd.f32 %v1044, 1.0
        %v1140 = vlog2.pop %v1139
        %v1141 = vmul.f32 %v1140, 0.6931472
        %v1142 = vmul.f32 -0.5, %v1044
        %v1143 = vadd.f32 %v1142, 1.0
        %v1144 = vmul.f32 %v1143, %v1044
        %v1145 = vand.u32 2147483647, %v1044
        %vm1146 = vcmp.lt.f32.partialorder %v1145, 0.0004427343
        %v1147 = vsel %vm1146, %v1144, %v1141
        %v1148 = vadd.f32 %v1046, 1.0
        %v1149 = vlog2.pop %v1148
        %v1150 = vmul.f32 %v1149, 0.6931472
        %v1151 = vmul.f32 -0.5, %v1046
        %v1152 = vadd.f32 %v1151, 1.0
        %v1153 = vmul.f32 %v1152, %v1046
        %v1154 = vand.u32 2147483647, %v1046
        %vm1155 = vcmp.lt.f32.partialorder %v1154, 0.0004427343
        %v1156 = vsel %vm1155, %v1153, %v1150
        %v1157 = vadd.f32 %v1048, 1.0
        %v1158 = vlog2.pop %v1157
        %v1159 = vmul.f32 %v1158, 0.6931472
        %v1160 = vmul.f32 -0.5, %v1048
        %v1161 = vadd.f32 %v1160, 1.0
        %v1162 = vmul.f32 %v1161, %v1048
        %v1163 = vand.u32 2147483647, %v1048
        %vm1164 = vcmp.lt.f32.partialorder %v1163, 0.0004427343
        %v1165 = vsel %vm1164, %v1162, %v1159
        %v1166 = vadd.f32 %v984, %v1057
        %v1167 = vadd.f32 %v985, %v1066
        %v1168 = vadd.f32 %v986, %v1075
        %v1169 = vadd.f32 %v987, %v1084
        %v1170 = vadd.f32 %v988, %v1093
        %v1171 = vadd.f32 %v989, %v1102
        %v1172 = vadd.f32 %v990, %v1111
        %v1173 = vadd.f32 %v991, %v1120
        %v1174 = vadd.f32 %v992, %v1129
        %v1175 = vadd.f32 %v993, %v1138
        %v1176 = vadd.f32 %v994, %v1147
        %v1177 = vadd.f32 %v995, %v1156
        %v1178 = vadd.f32 %v996, %v1165
        %v1179 = vsub.f32 %v970, %v1166
        %v1180 = vsub.f32 %v970, %v1167
        %v1181 = vsub.f32 %v970, %v1168
        %v1182 = vsub.f32 %v970, %v1169
        %v1183 = vsub.f32 %v970, %v1170
        %v1184 = vsub.f32 %v970, %v1171
        %v1185 = vsub.f32 %v970, %v1172
        %v1186 = vsub.f32 %v970, %v1173
        %v1187 = vsub.f32 %v970, %v1174
        %v1188 = vsub.f32 %v970, %v1175
        %v1189 = vsub.f32 %v970, %v1176
        %v1190 = vsub.f32 %v970, %v1177
        %v1191 = vsub.f32 %v970, %v1178
        %v1192 = vlaneseq
        %v1193 = vshrl.u32 %v1192, 7
        %v1194 = vsub.s32 0, %v1193
        %v1195 = vrot.slane %v966, %v1194
        %v1196 = vsub.f32 %v1179, %v1195
        %v1197 = vsub.f32 %v1180, %v1195
        %v1198 = vsub.f32 %v1181, %v1195
        %v1199 = vsub.f32 %v1182, %v1195
        %v1200 = vsub.f32 %v1183, %v1195
        %v1201 = vsub.f32 %v1184, %v1195
        %v1202 = vsub.f32 %v1185, %v1195
        %v1203 = vsub.f32 %v1186, %v1195
        %v1204 = vsub.f32 %v1187, %v1195
        %v1205 = vsub.f32 %v1188, %v1195
        %v1206 = vsub.f32 %v1189, %v1195
        %v1207 = vsub.f32 %v1190, %v1195
        %v1208 = vsub.f32 %v1191, %v1195
        %v1209 = vmax.f32 %v1196, 0.0
        %v1210 = vmax.f32 %v1197, 0.0
        %v1211 = vmax.f32 %v1198, 0.0
        %v1212 = vmax.f32 %v1199, 0.0
        %v1213 = vmax.f32 %v1200, 0.0
        %v1214 = vmax.f32 %v1201, 0.0
        %v1215 = vmax.f32 %v1202, 0.0
        %v1216 = vmax.f32 %v1203, 0.0
        %v1217 = vmax.f32 %v1204, 0.0
        %v1218 = vmax.f32 %v1205, 0.0
        %v1219 = vmax.f32 %v1206, 0.0
        %v1220 = vmax.f32 %v1207, 0.0
        %v1221 = vmax.f32 %v1208, 0.0
        %v1222 = vand.u32 2147483647, %v1196
        %v1223 = vand.u32 2147483647, %v1197
        %v1224 = vand.u32 2147483647, %v1198
        %v1225 = vand.u32 2147483647, %v1199
        %v1226 = vand.u32 2147483647, %v1200
        %v1227 = vand.u32 2147483647, %v1201
        %v1228 = vand.u32 2147483647, %v1202
        %v1229 = vand.u32 2147483647, %v1203
        %v1230 = vand.u32 2147483647, %v1204
        %v1231 = vand.u32 2147483647, %v1205
        %v1232 = vand.u32 2147483647, %v1206
        %v1233 = vand.u32 2147483647, %v1207
        %v1234 = vand.u32 2147483647, %v1208
        %v1235 = vsub.f32 0.0, %v1222
        %v1236 = vsub.f32 0.0, %v1223
        %v1237 = vsub.f32 0.0, %v1224
        %v1238 = vsub.f32 0.0, %v1225
        %v1239 = vsub.f32 0.0, %v1226
        %v1240 = vsub.f32 0.0, %v1227
        %v1241 = vsub.f32 0.0, %v1228
        %v1242 = vsub.f32 0.0, %v1229
        %v1243 = vsub.f32 0.0, %v1230
        %v1244 = vsub.f32 0.0, %v1231
        %v1245 = vsub.f32 0.0, %v1232
        %v1246 = vsub.f32 0.0, %v1233
        %v1247 = vsub.f32 0.0, %v1234
        %v1248 = vmul.f32 %v1235, 1.442695
        %v1249 = vpow.pop %v1248
        %v1250 = vmul.f32 %v1236, 1.442695
        %v1251 = vpow.pop %v1250
        %v1252 = vmul.f32 %v1237, 1.442695
        %v1253 = vpow.pop %v1252
        %v1254 = vmul.f32 %v1238, 1.442695
        %v1255 = vpow.pop %v1254
        %v1256 = vmul.f32 %v1239, 1.442695
        %v1257 = vpow.pop %v1256
        %v1258 = vmul.f32 %v1240, 1.442695
        %v1259 = vpow.pop %v1258
        %v1260 = vmul.f32 %v1241, 1.442695
        %v1261 = vpow.pop %v1260
        %v1262 = vmul.f32 %v1242, 1.442695
        %v1263 = vpow.pop %v1262
        %v1264 = vmul.f32 %v1243, 1.442695
        %v1265 = vpow.pop %v1264
        %v1266 = vmul.f32 %v1244, 1.442695
        %v1267 = vpow.pop %v1266
        %v1268 = vmul.f32 %v1245, 1.442695
        %v1269 = vpow.pop %v1268
        %v1270 = vmul.f32 %v1246, 1.442695
        %v1271 = vpow.pop %v1270
        %v1272 = vmul.f32 %v1247, 1.442695
        %v1273 = vpow.pop %v1272
        %v1274 = vadd.f32 %v1249, 1.0
        %v1275 = vlog2.pop %v1274
        %v1276 = vmul.f32 %v1275, 0.6931472
        %v1277 = vmul.f32 -0.5, %v1249
        %v1278 = vadd.f32 %v1277, 1.0
        %v1279 = vmul.f32 %v1278, %v1249
        %v1280 = vand.u32 2147483647, %v1249
        %vm1281 = vcmp.lt.f32.partialorder %v1280, 0.0004427343
        %v1282 = vsel %vm1281, %v1279, %v1276
        %v1283 = vadd.f32 %v1251, 1.0
        %v1284 = vlog2.pop %v1283
        %v1285 = vmul.f32 %v1284, 0.6931472
        %v1286 = vmul.f32 -0.5, %v1251
        %v1287 = vadd.f32 %v1286, 1.0
        %v1288 = vmul.f32 %v1287, %v1251
        %v1289 = vand.u32 2147483647, %v1251
        %vm1290 = vcmp.lt.f32.partialorder %v1289, 0.0004427343
        %v1291 = vsel %vm1290, %v1288, %v1285
        %v1292 = vadd.f32 %v1253, 1.0
        %v1293 = vlog2.pop %v1292
        %v1294 = vmul.f32 %v1293, 0.6931472
        %v1295 = vmul.f32 -0.5, %v1253
        %v1296 = vadd.f32 %v1295, 1.0
        %v1297 = vmul.f32 %v1296, %v1253
        %v1298 = vand.u32 2147483647, %v1253
        %vm1299 = vcmp.lt.f32.partialorder %v1298, 0.0004427343
        %v1300 = vsel %vm1299, %v1297, %v1294
        %v1301 = vadd.f32 %v1255, 1.0
        %v1302 = vlog2.pop %v1301
        %v1303 = vmul.f32 %v1302, 0.6931472
        %v1304 = vmul.f32 -0.5, %v1255
        %v1305 = vadd.f32 %v1304, 1.0
        %v1306 = vmul.f32 %v1305, %v1255
        %v1307 = vand.u32 2147483647, %v1255
        %vm1308 = vcmp.lt.f32.partialorder %v1307, 0.0004427343
        %v1309 = vsel %vm1308, %v1306, %v1303
        %v1310 = vadd.f32 %v1257, 1.0
        %v1311 = vlog2.pop %v1310
        %v1312 = vmul.f32 %v1311, 0.6931472
        %v1313 = vmul.f32 -0.5, %v1257
        %v1314 = vadd.f32 %v1313, 1.0
        %v1315 = vmul.f32 %v1314, %v1257
        %v1316 = vand.u32 2147483647, %v1257
        %vm1317 = vcmp.lt.f32.partialorder %v1316, 0.0004427343
        %v1318 = vsel %vm1317, %v1315, %v1312
        %v1319 = vadd.f32 %v1259, 1.0
        %v1320 = vlog2.pop %v1319
        %v1321 = vmul.f32 %v1320, 0.6931472
        %v1322 = vmul.f32 -0.5, %v1259
        %v1323 = vadd.f32 %v1322, 1.0
        %v1324 = vmul.f32 %v1323, %v1259
        %v1325 = vand.u32 2147483647, %v1259
        %vm1326 = vcmp.lt.f32.partialorder %v1325, 0.0004427343
        %v1327 = vsel %vm1326, %v1324, %v1321
        %v1328 = vadd.f32 %v1261, 1.0
        %v1329 = vlog2.pop %v1328
        %v1330 = vmul.f32 %v1329, 0.6931472
        %v1331 = vmul.f32 -0.5, %v1261
        %v1332 = vadd.f32 %v1331, 1.0
        %v1333 = vmul.f32 %v1332, %v1261
        %v1334 = vand.u32 2147483647, %v1261
        %vm1335 = vcmp.lt.f32.partialorder %v1334, 0.0004427343
        %v1336 = vsel %vm1335, %v1333, %v1330
        %v1337 = vadd.f32 %v1263, 1.0
        %v1338 = vlog2.pop %v1337
        %v1339 = vmul.f32 %v1338, 0.6931472
        %v1340 = vmul.f32 -0.5, %v1263
        %v1341 = vadd.f32 %v1340, 1.0
        %v1342 = vmul.f32 %v1341, %v1263
        %v1343 = vand.u32 2147483647, %v1263
        %vm1344 = vcmp.lt.f32.partialorder %v1343, 0.0004427343
        %v1345 = vsel %vm1344, %v1342, %v1339
        %v1346 = vadd.f32 %v1265, 1.0
        %v1347 = vlog2.pop %v1346
        %v1348 = vmul.f32 %v1347, 0.6931472
        %v1349 = vmul.f32 -0.5, %v1265
        %v1350 = vadd.f32 %v1349, 1.0
        %v1351 = vmul.f32 %v1350, %v1265
        %v1352 = vand.u32 2147483647, %v1265
        %vm1353 = vcmp.lt.f32.partialorder %v1352, 0.0004427343
        %v1354 = vsel %vm1353, %v1351, %v1348
        %v1355 = vadd.f32 %v1267, 1.0
        %v1356 = vlog2.pop %v1355
        %v1357 = vmul.f32 %v1356, 0.6931472
        %v1358 = vmul.f32 -0.5, %v1267
        %v1359 = vadd.f32 %v1358, 1.0
        %v1360 = vmul.f32 %v1359, %v1267
        %v1361 = vand.u32 2147483647, %v1267
        %vm1362 = vcmp.lt.f32.partialorder %v1361, 0.0004427343
        %v1363 = vsel %vm1362, %v1360, %v1357
        %v1364 = vadd.f32 %v1269, 1.0
        %v1365 = vlog2.pop %v1364
        %v1366 = vmul.f32 %v1365, 0.6931472
        %v1367 = vmul.f32 -0.5, %v1269
        %v1368 = vadd.f32 %v1367, 1.0
        %v1369 = vmul.f32 %v1368, %v1269
        %v1370 = vand.u32 2147483647, %v1269
        %vm1371 = vcmp.lt.f32.partialorder %v1370, 0.0004427343
        %v1372 = vsel %vm1371, %v1369, %v1366
        %v1373 = vadd.f32 %v1271, 1.0
        %v1374 = vlog2.pop %v1373
        %v1375 = vmul.f32 %v1374, 0.6931472
        %v1376 = vmul.f32 -0.5, %v1271
        %v1377 = vadd.f32 %v1376, 1.0
        %v1378 = vmul.f32 %v1377, %v1271
        %v1379 = vand.u32 2147483647, %v1271
        %vm1380 = vcmp.lt.f32.partialorder %v1379, 0.0004427343
        %v1381 = vsel %vm1380, %v1378, %v1375
        %v1382 = vadd.f32 %v1273, 1.0
        %v1383 = vlog2.pop %v1382
        %v1384 = vmul.f32 %v1383, 0.6931472
        %v1385 = vmul.f32 -0.5, %v1273
        %v1386 = vadd.f32 %v1385, 1.0
        %v1387 = vmul.f32 %v1386, %v1273
        %v1388 = vand.u32 2147483647, %v1273
        %vm1389 = vcmp.lt.f32.partialorder %v1388, 0.0004427343
        %v1390 = vsel %vm1389, %v1387, %v1384
        %v1391 = vadd.f32 %v1209, %v1282
        %v1392 = vadd.f32 %v1210, %v1291
        %v1393 = vadd.f32 %v1211, %v1300
        %v1394 = vadd.f32 %v1212, %v1309
        %v1395 = vadd.f32 %v1213, %v1318
        %v1396 = vadd.f32 %v1214, %v1327
        %v1397 = vadd.f32 %v1215, %v1336
        %v1398 = vadd.f32 %v1216, %v1345
        %v1399 = vadd.f32 %v1217, %v1354
        %v1400 = vadd.f32 %v1218, %v1363
        %v1401 = vadd.f32 %v1219, %v1372
        %v1402 = vadd.f32 %v1220, %v1381
        %v1403 = vadd.f32 %v1221, %v1390
        %v1404 = vadd.f32 %v1195, %v1391
        %v1405 = vadd.f32 %v1195, %v1392
        %v1406 = vadd.f32 %v1195, %v1393
        %v1407 = vadd.f32 %v1195, %v1394
        %v1408 = vadd.f32 %v1195, %v1395
        %v1409 = vadd.f32 %v1195, %v1396
        %v1410 = vadd.f32 %v1195, %v1397
        %v1411 = vadd.f32 %v1195, %v1398
        %v1412 = vadd.f32 %v1195, %v1399
        %v1413 = vadd.f32 %v1195, %v1400
        %v1414 = vadd.f32 %v1195, %v1401
        %v1415 = vadd.f32 %v1195, %v1402
        %v1416 = vadd.f32 %v1195, %v1403
        %v1417 = vlaneseq
        %v1418 = vand.u32 %v1417, 127
        %vm1419 = vcmp.lt.s32.totalorder %v1418, 16
        %v1420 = vmul.f32 %v1404, 1.442695
        %v1421 = vpow.pop %v1420
        %v1422 = vmul.f32 %v1405, 1.442695
        %v1423 = vpow.pop %v1422
        %v1424 = vmul.f32 %v1406, 1.442695
        %v1425 = vpow.pop %v1424
        %v1426 = vmul.f32 %v1407, 1.442695
        %v1427 = vpow.pop %v1426
        %v1428 = vmul.f32 %v1408, 1.442695
        %v1429 = vpow.pop %v1428
        %v1430 = vmul.f32 %v1409, 1.442695
        %v1431 = vpow.pop %v1430
        %v1432 = vmul.f32 %v1410, 1.442695
        %v1433 = vpow.pop %v1432
        %v1434 = vmul.f32 %v1411, 1.442695
        %v1435 = vpow.pop %v1434
        %v1436 = vmul.f32 %v1412, 1.442695
        %v1437 = vpow.pop %v1436
        %v1438 = vmul.f32 %v1413, 1.442695
        %v1439 = vpow.pop %v1438
        %v1440 = vmul.f32 %v1414, 1.442695
        %v1441 = vpow.pop %v1440
        %v1442 = vmul.f32 %v1415, 1.442695
        %v1443 = vpow.pop %v1442
        %v1444 = vmul.f32 %v1416, 1.442695
        %v1445 = vpow.pop %v1444
        %v1446 = vsel %vm1419, %v902, %v1421
        %v1447 = vsel %vm1419, %v907, %v1423
        %v1448 = vsel %vm1419, %v912, %v1425
        %v1449 = vsel %vm1419, %v917, %v1427
        %v1450 = vsel %vm1419, %v922, %v1429
        %v1451 = vsel %vm1419, %v927, %v1431
        %v1452 = vsel %vm1419, %v932, %v1433
        %v1453 = vsel %vm1419, %v937, %v1435
        %v1454 = vsel %vm1419, %v942, %v1437
        %v1455 = vsel %vm1419, %v947, %v1439
        %v1456 = vsel %vm1419, %v952, %v1441
        %v1457 = vsel %vm1419, %v957, %v1443
        %v1458 = vsel %vm1419, %v962, %v1445
        %1459 = vst [vmem:[%s302] sm:$0xff] %v1446
        %1460 = vst [vmem:[%s302 + $0x8] sm:$0xff] %v1447
        %1461 = vst [vmem:[%s302 + $0x10] sm:$0xff] %v1448
        %1462 = vst [vmem:[%s302 + $0x18] sm:$0xff] %v1449
        %1463 = vst [vmem:[%s302 + $0x20] sm:$0xff] %v1450
        %1464 = vst [vmem:[%s302 + $0x28] sm:$0xff] %v1451
        %1465 = vst [vmem:[%s302 + $0x30] sm:$0xff] %v1452
        %1466 = vst [vmem:[%s302 + $0x38] sm:$0xff] %v1453
        %1467 = vst [vmem:[%s302 + $0x40] sm:$0xff] %v1454
        %1468 = vst [vmem:[%s302 + $0x48] sm:$0xff] %v1455
        %1469 = vst [vmem:[%s302 + $0x50] sm:$0xff] %v1456
        %1470 = vst [vmem:[%s302 + $0x58] sm:$0xff] %v1457
        %1471 = vst [vmem:[%s302 + $0x60] sm:$0xff] %v1458
        %s1472 = sand.u32 %s183, 1
        %s1473 = scalar_lea.sflag [#allocation4], %s1472
        %s1474 = sand.u32 %s183, 1
        %s1475 = smul.addr %s1474, 104
        %s1476 = scalar_lea.vmem [#allocation7], %s1475
        // Predicated region
        $region57: #{tpu_custom_call.1} parent=47 // pred_check
          %p1477 = pneg %p193
        $region58: #{tpu_custom_call.1} parent=47 // pred_check_branch
          %1479 = sbr.rel (%p1477) target = $region60
        $region59: #{tpu_custom_call.1} parent=47 // pred_region
          %s1480 = smul.u32 13, %s23
          %s1482 = ssub.s32 1664, 1664
          %1483 = vsyncadd %s1473, %s1482
          %s1484 = smul.addr %s1480, 128
          %s1485 = scalar_lea.hbm %s7, %s1484
          %s1486 = sshll.u32 %s1476, 4
          %s1487 = int_to_ptr.vmem [resolvable:$true] %s1486
          %1492 = dma.vmem_to_hbm [thread:$0]  %s1487, 1664, %s1485, %s1473, 128, 128, 8
        $region60: #{tpu_custom_call.1} parent=47 // pred_fallthru
          _
      $region48: #{tpu_custom_call.1} parent=5 // pred_fallthru
        _
      %p1493 = scmp.le.s32.totalorder 2, %s18
      // Predicated region
      $region61: #{tpu_custom_call.1} parent=5 // pred_check
        %p1494 = pneg %p1493
      $region62: #{tpu_custom_call.1} parent=5 // pred_check_branch
        %1496 = sbr.rel (%p1494) target = $region64
      $region63: #{tpu_custom_call.1} parent=5 // pred_region
        %s1497 = ssub.s32 %s18, 2
        // Predicated region
        $region65: #{tpu_custom_call.1} parent=63 // pred_check
          %p1498 = pneg %p199
        $region66: #{tpu_custom_call.1} parent=63 // pred_check_branch
          %1500 = sbr.rel (%p1498) target = $region68
        $region67: #{tpu_custom_call.1} parent=63 // pred_region
          %s1501 = sand.u32 %s184, 1
          %s1502 = scalar_lea.sflag [#allocation4], %s1501
          %s1503 = sand.u32 %s184, 1
          %s1504 = smul.addr %s1503, 104
          %s1505 = scalar_lea.vmem [#allocation7], %s1504
          %1506 = dma.done %s1502, 1664
        $region68: #{tpu_custom_call.1} parent=63 // pred_fallthru
          _
      $region64: #{tpu_custom_call.1} parent=5 // pred_fallthru
        _
    $region6: #{tpu_custom_call.1} parent=1 // loop_footer
      %s22 = sadd.s32 1, %s18
    $region7: #{tpu_custom_call.1} parent=1 // loop_footer_branch
      %17 = sbr.rel target = $region3
    $region8: #{tpu_custom_call.1} parent=1 // loop_exit
      _
    %1507 = vsyncpa [#allocation3], 1
    %s1508 = scalar_lea.sflag [#allocation3], 1
    %1509 = vsyncpa %s1508, 1
    %1510 = vsyncpa [#allocation6], 1
    %1511 = vsyncpa [#allocation4], 1
    %s1512 = scalar_lea.sflag [#allocation4], 1
    %1513 = vsyncpa %s1512, 1

</llo_original>
